<compile_context>
chip_gen: v6e
topology: v6e:2x2x1
jax: 0.10.0
libtpu: 0.0.40
codegen_flags: <defaults>
</compile_context>

<pallas_src>
import jax
import jax.numpy as jnp
from jax.experimental import pallas as pl
from jax.experimental.pallas import tpu as pltpu


def length_decoder_kernel(
    lens_ref,     # [TB, 1]    i32  per-row command lengths
    enc_cmd_ref,  # [L, TB, H] bf16 encoded_commands (native time-major layout)
    hidden_ref,   # [TB, H]    bf16 last decoder hidden state (layer 0)
    enc_sit_ref,  # [TB, M, H] bf16 encoded_situations
    wk_txt_ref,   # [H, H]  bf16 textual key_layer weight (in x out)
    wk_vis_ref,   # [H, H]  bf16 visual  key_layer weight (in x out)
    wq_txt_ref,   # [H, H]  bf16 textual query_layer weight (in x out)
    wq_vis_ref,   # [H, H]  bf16 visual  query_layer weight (in x out)
    we_txt_ref,   # [H, 1]  f32 textual energy_layer weight (column)
    we_vis_ref,   # [H, 1]  f32 visual  energy_layer weight (column)
    v_cmd_ref,    # [H, 1]  f32 folded output head, command-context column
    v_sit_ref,    # [H, 1]  f32 folded output head, situation-context column
    bias_ref,     # (1, 1)  f32 SMEM scalar: sos_embedding . v_sos
    out_ref,      # [TB, 128] f32 lane-dense output slab (value broadcast over lanes)
):
    L, TB, H = enc_cmd_ref.shape
    M = enc_sit_ref.shape[1]
    f32 = jnp.float32

    # --- key projections (Attention.key_layer): bf16 MXU matmuls, f32 accumulate ---
    pk_txt = jnp.dot(enc_cmd_ref[...].reshape(L * TB, H), wk_txt_ref[...],
                     preferred_element_type=f32).reshape(L, TB, H)
    pk_vis = jnp.dot(enc_sit_ref[...].reshape(TB * M, H), wk_vis_ref[...],
                     preferred_element_type=f32).reshape(TB, M, H)

    # --- query projections (un-fused: avoids a mid-tile lane slice when H < 128) ---
    h = hidden_ref[...]
    q_txt = jnp.dot(h, wq_txt_ref[...], preferred_element_type=f32)   # [TB, H] f32
    q_vis = jnp.dot(h, wq_vis_ref[...], preferred_element_type=f32)   # [TB, H] f32

    # --- textual attention (time-major; values == projected keys per the module) ---
    e_txt = jnp.tanh(q_txt[None, :, :] + pk_txt)                      # [L, TB, H] f32
    # Energy reduction on the MXU ([L*TB, H] @ [H, 1]) instead of an XLU lane-reduce.
    s_txt = jnp.dot(e_txt.reshape(L * TB, H), we_txt_ref[...],
                    preferred_element_type=f32)                       # [L*TB, 1]
    # Additive length mask built in-kernel from the tiny [TB,1] i32 lengths tile.
    # L is small here, so an unrolled compare/select per time step keeps the mask
    # in the same [*, TB, 1] layout as the scores with no iota / relayout.
    lens = lens_ref[...]                                              # [TB, 1] i32
    add_mask = jnp.concatenate(
        [jnp.where(lens > l, 0.0, -1e30).astype(f32) for l in range(L)],
        axis=0)                                                       # [L*TB, 1]
    s_txt = (s_txt + add_mask).reshape(L, TB, 1)                      # finite sentinel
    m_t = jnp.max(s_txt, axis=0, keepdims=True)                       # [1, TB, 1]
    p_t = jnp.exp(s_txt - m_t)
    inv_t = pl.reciprocal(jnp.sum(p_t, axis=0, keepdims=True), approx=True)
    aw_txt = p_t * inv_t                                              # [L, TB, 1]
    ctx_cmd = jnp.sum(aw_txt * pk_txt, axis=0)                        # [TB, H] f32

    # --- visual attention: all M memories valid (situation_lengths == M) ---
    e_vis = jnp.tanh(q_vis[:, None, :] + pk_vis)                      # [TB, M, H] f32
    s_vis = jnp.dot(e_vis.reshape(TB * M, H), we_vis_ref[...],
                    preferred_element_type=f32).reshape(TB, M, 1)     # [TB, M, 1]
    m_v = jnp.max(s_vis, axis=1, keepdims=True)
    p_v = jnp.exp(s_vis - m_v)
    inv_v = pl.reciprocal(jnp.sum(p_v, axis=1, keepdims=True), approx=True)
    aw_vis = p_v * inv_v                                              # [TB, M, 1]
    ctx_sit = jnp.sum(aw_vis * pk_vis, axis=1)                        # [TB, H] f32

    # --- folded output head on the MXU (dropout is identity in eval mode) ---
    # concat(sos, ctx_cmd, ctx_sit) @ W_o2h^T @ W_h2o^T
    #   == ctx_cmd @ v_cmd + ctx_sit @ v_sit + (sos . v_sos)
    res = (jnp.dot(ctx_cmd, v_cmd_ref[...], preferred_element_type=f32)
           + jnp.dot(ctx_sit, v_sit_ref[...], preferred_element_type=f32)
           + bias_ref[0, 0])                                          # [TB, 1]
    out_ref[...] = jnp.broadcast_to(res, out_ref.shape)               # lane-dense store
    # TODO(synk): at large TB*H, chunk the L / M attention loops with lax.fori_loop
    # instead of materializing pk/e whole, to bound the VMEM live set on v7x.


def prepare_params(params):
    """Fold / transpose / cast the PyTorch-layout weights ONCE, outside the hot path."""
    H = params["wq_txt"].shape[0]
    bf16, f32 = jnp.bfloat16, jnp.float32
    # Folded output head: out = concat @ W_o2h^T @ W_h2o^T = concat @ v, v: [3H, 1]
    v = (params["w_o2h"].T @ params["w_h2o"].T).astype(f32)             # [3H, 1]
    return {
        "wk_txt": params["wk_txt"].T.astype(bf16),                      # [H, H]
        "wk_vis": params["wk_vis"].T.astype(bf16),                      # [H, H]
        "wq_txt": params["wq_txt"].T.astype(bf16),                      # [H, H]
        "wq_vis": params["wq_vis"].T.astype(bf16),                      # [H, H]
        "we_txt": params["we_txt"].T.astype(f32),                       # [H, 1]
        "we_vis": params["we_vis"].T.astype(f32),                       # [H, 1]
        "v_cmd": v[H:2 * H],                                            # [H, 1]
        "v_sit": v[2 * H:],                                             # [H, 1]
        "bias": (params["sos"].astype(f32) @ v[:H, 0]).reshape(1, 1),   # [1, 1]
    }


def _round_up(x, m):
    return ((x + m - 1) // m) * m


def _choose_batch_tile(B, L, M, H):
    """Batch tile selection (trace-time, static shapes):
      - sized against a ~24 MiB per-tile VMEM working-set budget (headroom under
        v7x's 64 MiB; well under v5e/v6e's 128 MiB), capped at 256 rows,
      - multiple of 16 when the padded batch exceeds one sublane tile (bf16 packing),
      - split into >=2 tiles when the batch allows it so the 'parallel' grid axis
        can be sharded across v7x's two TensorCores."""
    # bytes/row: double-buffered bf16 inputs + ~4x f32 pk/e/aw temporaries
    per_row = 2 * 2 * (L * H + M * H + 3 * H) + 4 * 4 * (L * H + M * H)
    budget = 24 * 1024 * 1024
    cap = max(16, min(256, (budget // max(per_row, 1)) // 16 * 16))
    if B <= 8:
        return 8, 8                                   # single full-batch tile
    Bp = _round_up(B, 16)
    tb = min(cap, Bp)
    if tb == Bp and Bp >= 32:                         # prefer >=2 tiles (megacore)
        tb = _round_up(Bp // 2, 16)
    Bp = _round_up(Bp, tb)
    return Bp, tb


@jax.jit
def _forward_impl(prepared, last_hidden, encoded_commands, commands_lengths,
                  encoded_situations):
    L, B, H = encoded_commands.shape
    M = encoded_situations.shape[1]
    Bp, TB = _choose_batch_tile(B, L, M, H)
    num_tiles = Bp // TB
    pad = Bp - B
    bf16 = jnp.bfloat16

    # bf16 through the DMA and the MXU; padded rows are zeros with length L so
    # their softmax stays finite (they are sliced away below).
    enc_cmd = jnp.pad(encoded_commands.astype(bf16), ((0, 0), (0, pad), (0, 0)))
    enc_sit = jnp.pad(encoded_situations.astype(bf16), ((0, pad), (0, 0), (0, 0)))
    hidden = jnp.pad(last_hidden.astype(bf16), ((0, pad), (0, 0)))
    lens = jnp.pad(commands_lengths.astype(jnp.int32), (0, pad),
                   constant_values=L).reshape(Bp, 1)

    out_slab = pl.pallas_call(
        length_decoder_kernel,
        out_shape=jax.ShapeDtypeStruct((Bp, 128), jnp.float32),
        grid=(num_tiles,),
        in_specs=[
            pl.BlockSpec((TB, 1), lambda i: (i, 0)),          # command lengths (i32)
            pl.BlockSpec((L, TB, H), lambda i: (0, i, 0)),    # encoded_commands (bf16)
            pl.BlockSpec((TB, H), lambda i: (i, 0)),          # last hidden (bf16)
            pl.BlockSpec((TB, M, H), lambda i: (i, 0, 0)),    # encoded_situations (bf16)
            pl.BlockSpec((H, H), lambda i: (0, 0)),           # wk_txt (resident)
            pl.BlockSpec((H, H), lambda i: (0, 0)),           # wk_vis (resident)
            pl.BlockSpec((H, H), lambda i: (0, 0)),           # wq_txt (resident)
            pl.BlockSpec((H, H), lambda i: (0, 0)),           # wq_vis (resident)
            pl.BlockSpec((H, 1), lambda i: (0, 0)),           # we_txt column
            pl.BlockSpec((H, 1), lambda i: (0, 0)),           # we_vis column
            pl.BlockSpec((H, 1), lambda i: (0, 0)),           # v_cmd column
            pl.BlockSpec((H, 1), lambda i: (0, 0)),           # v_sit column
            pl.BlockSpec(memory_space=pltpu.MemorySpace.SMEM),  # sos bias scalar
        ],
        out_specs=pl.BlockSpec((TB, 128), lambda i: (i, 0)),
        compiler_params=pltpu.CompilerParams(
            dimension_semantics=("parallel",),
            vmem_limit_bytes=48 * 1024 * 1024),
        # NOTE: at large H, the three resident weight tiles could additionally use
        # pipeline_mode=pl.Buffered(1) to drop their second pipeline buffer.
    )(
        lens, enc_cmd, hidden, enc_sit,
        prepared["wk_txt"], prepared["wk_vis"],
        prepared["wq_txt"], prepared["wq_vis"],
        prepared["we_txt"], prepared["we_vis"],
        prepared["v_cmd"], prepared["v_sit"], prepared["bias"],
    )
    return out_slab[:B, 0]                                    # [B]


def length_decoder_forward(prepared, input_tokens, input_lengths, init_hidden,
                           encoded_commands, commands_lengths, encoded_situations):
    """Mirrors LengthDecoder.forward (input_tokens/input_lengths are unused there)."""
    del input_tokens, input_lengths
    h0, _c0 = init_hidden                       # each [num_layers, B, H]
    last_hidden = h0[0]                         # num_layers == 1 (module broadcast req.)
    lens = jnp.asarray(commands_lengths, jnp.int32)
    return _forward_impl(prepared, last_hidden, encoded_commands, lens,
                         encoded_situations)


def reference_forward(params, init_hidden, encoded_commands, commands_lengths,
                      encoded_situations):
    """Pure-JAX f32 reference reproducing LengthDecoder.forward (eval mode)."""
    h0, _ = init_hidden
    h = h0[0]                                                   # [B, H]
    L, B, H = encoded_commands.shape
    M = encoded_situations.shape[1]

    pk_txt = jnp.einsum("lbh,gh->blg", encoded_commands, params["wk_txt"])    # [B, L, H]
    pk_vis = jnp.einsum("bmh,gh->bmg", encoded_situations, params["wk_vis"])  # [B, M, H]

    def attend(q, pk, we, lengths):
        e = jnp.tanh(q[:, None, :] + pk)
        scores = jnp.einsum("bmh,h->bm", e, we[0])
        mask = jnp.arange(pk.shape[1])[None, :] < lengths[:, None]
        scores = jnp.where(mask, scores, -jnp.inf)
        aw = jax.nn.softmax(scores, axis=-1)
        return jnp.einsum("bm,bmh->bh", aw, pk)

    q_txt = h @ params["wq_txt"].T
    q_vis = h @ params["wq_vis"].T
    ctx_cmd = attend(q_txt, pk_txt, params["we_txt"],
                     jnp.asarray(commands_lengths, jnp.int32))
    ctx_sit = attend(q_vis, pk_vis, params["we_vis"],
                     jnp.full((B,), M, jnp.int32))
    embed_input = jnp.broadcast_to(params["sos"][None, :], (B, H))
    concat = jnp.concatenate([embed_input, ctx_cmd, ctx_sit], axis=1)
    pre = concat @ params["w_o2h"].T
    out = pre @ params["w_h2o"].T
    return out[:, 0]


def init_params(key, hidden_size):
    H = hidden_size
    ks = jax.random.split(key, 9)
    scale = 0.1
    return {
        "wk_txt": scale * jax.random.normal(ks[0], (H, H), jnp.float32),
        "wq_txt": scale * jax.random.normal(ks[1], (H, H), jnp.float32),
        "we_txt": scale * jax.random.normal(ks[2], (1, H), jnp.float32),
        "wk_vis": scale * jax.random.normal(ks[3], (H, H), jnp.float32),
        "wq_vis": scale * jax.random.normal(ks[4], (H, H), jnp.float32),
        "we_vis": scale * jax.random.normal(ks[5], (1, H), jnp.float32),
        "sos": jax.random.normal(ks[6], (H,), jnp.float32),      # nn.init.normal_
        "w_o2h": scale * jax.random.normal(ks[7], (H, 3 * H), jnp.float32),
        "w_h2o": scale * jax.random.normal(ks[8], (1, H), jnp.float32),
    }


if __name__ == "__main__":
    B, H, L, M, NUM_LAYERS = 2, 32, 8, 16, 1    # M = image_width**2 = 4*4
    key = jax.random.PRNGKey(0)
    k_param, k_cmd, k_sit, k_msg = jax.random.split(key, 4)

    params = init_params(k_param, H)
    prepared = prepare_params(params)            # one-time weight prep (not per call)

    encoded_commands = jax.random.normal(k_cmd, (L, B, H), jnp.float32)    # [L, B, H]
    encoded_situations = jax.random.normal(k_sit, (B, M, H), jnp.float32)  # [B, M, H]
    encoder_message = jax.random.normal(k_msg, (B, H), jnp.float32)

    # initialize_hidden: same message copied into hidden and cell for all layers
    init_h = jnp.broadcast_to(encoder_message[None], (NUM_LAYERS, B, H))
    init_hidden = (init_h, init_h)

    commands_lengths = [8, 5]
    input_tokens = jnp.zeros((B, 4), jnp.int32)   # unused by forward
    input_lengths = [4, 4]                        # unused by forward

    out = length_decoder_forward(prepared, input_tokens, input_lengths, init_hidden,
                                 encoded_commands, commands_lengths,
                                 encoded_situations)
    out = jax.block_until_ready(out)

    ref = reference_forward(params, init_hidden, encoded_commands,
                            commands_lengths, encoded_situations)
    ref = jax.block_until_ready(ref)

    assert out.shape == (B,), out.shape
    # bf16 activations/weights + approx reciprocal -> looser tolerance than pure f32.
    assert jnp.allclose(out, ref, atol=3e-2, rtol=3e-2), (out, ref)
    print("KERNEL_OK")
</pallas_src>

<mosaic_0001>
module attributes {stable_mosaic.version = 11 : i64} {
  func.func @length_decoder_kernel(%arg0: i32, %arg1: memref<8x1xi32, #tpu.memory_space<vmem>>, %arg2: memref<8x8x32xbf16, #tpu.memory_space<vmem>>, %arg3: memref<8x32xbf16, #tpu.memory_space<vmem>>, %arg4: memref<8x16x32xbf16, #tpu.memory_space<vmem>>, %arg5: memref<32x32xbf16, #tpu.memory_space<vmem>>, %arg6: memref<32x32xbf16, #tpu.memory_space<vmem>>, %arg7: memref<32x32xbf16, #tpu.memory_space<vmem>>, %arg8: memref<32x32xbf16, #tpu.memory_space<vmem>>, %arg9: memref<32x1xf32, #tpu.memory_space<vmem>>, %arg10: memref<32x1xf32, #tpu.memory_space<vmem>>, %arg11: memref<32x1xf32, #tpu.memory_space<vmem>>, %arg12: memref<32x1xf32, #tpu.memory_space<vmem>>, %arg13: memref<1x1xf32, #tpu.memory_space<smem>>, %arg14: memref<8x128xf32, #tpu.memory_space<vmem>>) attributes {dimension_semantics = [#tpu.dimension_semantics<parallel>], iteration_bounds = array<i64: 1>, scalar_prefetch = 0 : i64, scratch_operands = 0 : i64, tpu.core_type = #tpu.core_type<tc>, window_params = [{transform_indices = @transform_0, window_bounds = array<i64: 8, 1>}, {transform_indices = @transform_1, window_bounds = array<i64: 8, 8, 32>}, {transform_indices = @transform_2, window_bounds = array<i64: 8, 32>}, {transform_indices = @transform_3, window_bounds = array<i64: 8, 16, 32>}, {pipeline_mode = #tpu.pipeline_mode<synchronous>, transform_indices = @transform_4, window_bounds = array<i64: 32, 32>}, {pipeline_mode = #tpu.pipeline_mode<synchronous>, transform_indices = @transform_5, window_bounds = array<i64: 32, 32>}, {pipeline_mode = #tpu.pipeline_mode<synchronous>, transform_indices = @transform_6, window_bounds = array<i64: 32, 32>}, {pipeline_mode = #tpu.pipeline_mode<synchronous>, transform_indices = @transform_7, window_bounds = array<i64: 32, 32>}, {pipeline_mode = #tpu.pipeline_mode<synchronous>, transform_indices = @transform_8, window_bounds = array<i64: 32, 1>}, {pipeline_mode = #tpu.pipeline_mode<synchronous>, transform_indices = @transform_9, window_bounds = array<i64: 32, 1>}, {pipeline_mode = #tpu.pipeline_mode<synchronous>, transform_indices = @transform_10, window_bounds = array<i64: 32, 1>}, {pipeline_mode = #tpu.pipeline_mode<synchronous>, transform_indices = @transform_11, window_bounds = array<i64: 32, 1>}, {transform_indices = @transform_12, window_bounds = array<i64: 1, 1>}, {transform_indices = @transform_13, window_bounds = array<i64: 8, 128>}]} {
    %c0 = arith.constant 0 : index
    %c0_0 = arith.constant 0 : index
    %c0_1 = arith.constant 0 : index
    %0 = vector.load %arg2[%c0, %c0_0, %c0_1] : memref<8x8x32xbf16, #tpu.memory_space<vmem>>, vector<8x8x32xbf16>
    %1 = vector.shape_cast %0 : vector<8x8x32xbf16> to vector<64x32xbf16>
    %c0_2 = arith.constant 0 : index
    %c0_3 = arith.constant 0 : index
    %2 = vector.load %arg5[%c0_2, %c0_3] : memref<32x32xbf16, #tpu.memory_space<vmem>>, vector<32x32xbf16>
    %cst = arith.constant dense<0.000000e+00> : vector<64x32xf32>
    %3 = tpu.matmul %1, %2, %cst {dimension_numbers = #tpu.dot_dimension_numbers<[1], [0], [0], [1], [0, 0, 1, 1], [], []>} : vector<64x32xbf16>, vector<32x32xbf16>, vector<64x32xf32> -> vector<64x32xf32>
    %4 = vector.shape_cast %3 : vector<64x32xf32> to vector<8x8x32xf32>
    %c0_4 = arith.constant 0 : index
    %c0_5 = arith.constant 0 : index
    %c0_6 = arith.constant 0 : index
    %5 = vector.load %arg4[%c0_4, %c0_5, %c0_6] : memref<8x16x32xbf16, #tpu.memory_space<vmem>>, vector<8x16x32xbf16>
    %6 = vector.shape_cast %5 : vector<8x16x32xbf16> to vector<128x32xbf16>
    %c0_7 = arith.constant 0 : index
    %c0_8 = arith.constant 0 : index
    %7 = vector.load %arg6[%c0_7, %c0_8] : memref<32x32xbf16, #tpu.memory_space<vmem>>, vector<32x32xbf16>
    %cst_9 = arith.constant dense<0.000000e+00> : vector<128x32xf32>
    %8 = tpu.matmul %6, %7, %cst_9 {dimension_numbers = #tpu.dot_dimension_numbers<[1], [0], [0], [1], [0, 0, 1, 1], [], []>} : vector<128x32xbf16>, vector<32x32xbf16>, vector<128x32xf32> -> vector<128x32xf32>
    %9 = vector.shape_cast %8 : vector<128x32xf32> to vector<8x16x32xf32>
    %c0_10 = arith.constant 0 : index
    %c0_11 = arith.constant 0 : index
    %10 = vector.load %arg3[%c0_10, %c0_11] : memref<8x32xbf16, #tpu.memory_space<vmem>>, vector<8x32xbf16>
    %c0_12 = arith.constant 0 : index
    %c0_13 = arith.constant 0 : index
    %11 = vector.load %arg7[%c0_12, %c0_13] : memref<32x32xbf16, #tpu.memory_space<vmem>>, vector<32x32xbf16>
    %cst_14 = arith.constant dense<0.000000e+00> : vector<8x32xf32>
    %12 = tpu.matmul %10, %11, %cst_14 {dimension_numbers = #tpu.dot_dimension_numbers<[1], [0], [0], [1], [0, 0, 1, 1], [], []>} : vector<8x32xbf16>, vector<32x32xbf16>, vector<8x32xf32> -> vector<8x32xf32>
    %c0_15 = arith.constant 0 : index
    %c0_16 = arith.constant 0 : index
    %13 = vector.load %arg8[%c0_15, %c0_16] : memref<32x32xbf16, #tpu.memory_space<vmem>>, vector<32x32xbf16>
    %cst_17 = arith.constant dense<0.000000e+00> : vector<8x32xf32>
    %14 = tpu.matmul %10, %13, %cst_17 {dimension_numbers = #tpu.dot_dimension_numbers<[1], [0], [0], [1], [0, 0, 1, 1], [], []>} : vector<8x32xbf16>, vector<32x32xbf16>, vector<8x32xf32> -> vector<8x32xf32>
    %15 = vector.shape_cast %12 : vector<8x32xf32> to vector<1x8x32xf32>
    %16 = vector.broadcast %15 : vector<1x8x32xf32> to vector<8x8x32xf32>
    %17 = arith.addf %16, %4 : vector<8x8x32xf32>
    %18 = math.tanh %17 : vector<8x8x32xf32>
    %19 = vector.shape_cast %18 : vector<8x8x32xf32> to vector<64x32xf32>
    %c0_18 = arith.constant 0 : index
    %c0_19 = arith.constant 0 : index
    %20 = vector.load %arg9[%c0_18, %c0_19] : memref<32x1xf32, #tpu.memory_space<vmem>>, vector<32x1xf32>
    %cst_20 = arith.constant dense<0.000000e+00> : vector<64x1xf32>
    %21 = tpu.matmul %19, %20, %cst_20 {dimension_numbers = #tpu.dot_dimension_numbers<[1], [0], [0], [1], [0, 0, 1, 1], [], []>} : vector<64x32xf32>, vector<32x1xf32>, vector<64x1xf32> -> vector<64x1xf32>
    %c0_21 = arith.constant 0 : index
    %c0_22 = arith.constant 0 : index
    %22 = vector.load %arg1[%c0_21, %c0_22] : memref<8x1xi32, #tpu.memory_space<vmem>>, vector<8x1xi32>
    %c0_i32 = arith.constant 0 : i32
    %23 = vector.broadcast %c0_i32 : i32 to vector<8x1xi32>
    %24 = arith.cmpi sgt, %22, %23 : vector<8x1xi32>
    %cst_23 = arith.constant 0.000000e+00 : f32
    %cst_24 = arith.constant -1.000000e+30 : f32
    %25 = vector.broadcast %cst_23 : f32 to vector<8x1xf32>
    %26 = vector.broadcast %cst_24 : f32 to vector<8x1xf32>
    %27 = arith.select %24, %25, %26 : vector<8x1xi1>, vector<8x1xf32>
    %c1_i32 = arith.constant 1 : i32
    %28 = vector.broadcast %c1_i32 : i32 to vector<8x1xi32>
    %29 = arith.cmpi sgt, %22, %28 : vector<8x1xi32>
    %cst_25 = arith.constant 0.000000e+00 : f32
    %cst_26 = arith.constant -1.000000e+30 : f32
    %30 = vector.broadcast %cst_25 : f32 to vector<8x1xf32>
    %31 = vector.broadcast %cst_26 : f32 to vector<8x1xf32>
    %32 = arith.select %29, %30, %31 : vector<8x1xi1>, vector<8x1xf32>
    %c2_i32 = arith.constant 2 : i32
    %33 = vector.broadcast %c2_i32 : i32 to vector<8x1xi32>
    %34 = arith.cmpi sgt, %22, %33 : vector<8x1xi32>
    %cst_27 = arith.constant 0.000000e+00 : f32
    %cst_28 = arith.constant -1.000000e+30 : f32
    %35 = vector.broadcast %cst_27 : f32 to vector<8x1xf32>
    %36 = vector.broadcast %cst_28 : f32 to vector<8x1xf32>
    %37 = arith.select %34, %35, %36 : vector<8x1xi1>, vector<8x1xf32>
    %c3_i32 = arith.constant 3 : i32
    %38 = vector.broadcast %c3_i32 : i32 to vector<8x1xi32>
    %39 = arith.cmpi sgt, %22, %38 : vector<8x1xi32>
    %cst_29 = arith.constant 0.000000e+00 : f32
    %cst_30 = arith.constant -1.000000e+30 : f32
    %40 = vector.broadcast %cst_29 : f32 to vector<8x1xf32>
    %41 = vector.broadcast %cst_30 : f32 to vector<8x1xf32>
    %42 = arith.select %39, %40, %41 : vector<8x1xi1>, vector<8x1xf32>
    %c4_i32 = arith.constant 4 : i32
    %43 = vector.broadcast %c4_i32 : i32 to vector<8x1xi32>
    %44 = arith.cmpi sgt, %22, %43 : vector<8x1xi32>
    %cst_31 = arith.constant 0.000000e+00 : f32
    %cst_32 = arith.constant -1.000000e+30 : f32
    %45 = vector.broadcast %cst_31 : f32 to vector<8x1xf32>
    %46 = vector.broadcast %cst_32 : f32 to vector<8x1xf32>
    %47 = arith.select %44, %45, %46 : vector<8x1xi1>, vector<8x1xf32>
    %c5_i32 = arith.constant 5 : i32
    %48 = vector.broadcast %c5_i32 : i32 to vector<8x1xi32>
    %49 = arith.cmpi sgt, %22, %48 : vector<8x1xi32>
    %cst_33 = arith.constant 0.000000e+00 : f32
    %cst_34 = arith.constant -1.000000e+30 : f32
    %50 = vector.broadcast %cst_33 : f32 to vector<8x1xf32>
    %51 = vector.broadcast %cst_34 : f32 to vector<8x1xf32>
    %52 = arith.select %49, %50, %51 : vector<8x1xi1>, vector<8x1xf32>
    %c6_i32 = arith.constant 6 : i32
    %53 = vector.broadcast %c6_i32 : i32 to vector<8x1xi32>
    %54 = arith.cmpi sgt, %22, %53 : vector<8x1xi32>
    %cst_35 = arith.constant 0.000000e+00 : f32
    %cst_36 = arith.constant -1.000000e+30 : f32
    %55 = vector.broadcast %cst_35 : f32 to vector<8x1xf32>
    %56 = vector.broadcast %cst_36 : f32 to vector<8x1xf32>
    %57 = arith.select %54, %55, %56 : vector<8x1xi1>, vector<8x1xf32>
    %c7_i32 = arith.constant 7 : i32
    %58 = vector.broadcast %c7_i32 : i32 to vector<8x1xi32>
    %59 = arith.cmpi sgt, %22, %58 : vector<8x1xi32>
    %cst_37 = arith.constant 0.000000e+00 : f32
    %cst_38 = arith.constant -1.000000e+30 : f32
    %60 = vector.broadcast %cst_37 : f32 to vector<8x1xf32>
    %61 = vector.broadcast %cst_38 : f32 to vector<8x1xf32>
    %62 = arith.select %59, %60, %61 : vector<8x1xi1>, vector<8x1xf32>
    %63 = tpu.concatenate %27, %32, %37, %42, %47, %52, %57, %62 in 0 : vector<8x1xf32>, vector<8x1xf32>, vector<8x1xf32>, vector<8x1xf32>, vector<8x1xf32>, vector<8x1xf32>, vector<8x1xf32>, vector<8x1xf32> -> vector<64x1xf32>
    %64 = arith.addf %21, %63 : vector<64x1xf32>
    %65 = vector.shape_cast %64 : vector<64x1xf32> to vector<8x8x1xf32>
    %cst_39 = arith.constant dense<0xFF800000> : vector<8x1xf32>
    %66 = vector.multi_reduction <maximumf>, %65, %cst_39 [0] : vector<8x8x1xf32> to vector<8x1xf32>
    %67 = vector.shape_cast %66 : vector<8x1xf32> to vector<1x8x1xf32>
    %68 = vector.broadcast %67 : vector<1x8x1xf32> to vector<8x8x1xf32>
    %69 = arith.subf %65, %68 : vector<8x8x1xf32>
    %70 = math.exp %69 : vector<8x8x1xf32>
    %cst_40 = arith.constant dense<0.000000e+00> : vector<8x1xf32>
    %71 = vector.multi_reduction <add>, %70, %cst_40 [0] : vector<8x8x1xf32> to vector<8x1xf32>
    %72 = vector.shape_cast %71 : vector<8x1xf32> to vector<1x8x1xf32>
    %73 = tpu.reciprocal %72 {approx = true} : vector<1x8x1xf32> -> vector<1x8x1xf32>
    %74 = vector.broadcast %73 : vector<1x8x1xf32> to vector<8x8x1xf32>
    %75 = arith.mulf %70, %74 : vector<8x8x1xf32>
    %76 = vector.broadcast %75 : vector<8x8x1xf32> to vector<8x8x32xf32>
    %77 = arith.mulf %76, %4 : vector<8x8x32xf32>
    %cst_41 = arith.constant dense<0.000000e+00> : vector<8x32xf32>
    %78 = vector.multi_reduction <add>, %77, %cst_41 [0] : vector<8x8x32xf32> to vector<8x32xf32>
    %79 = vector.shape_cast %14 : vector<8x32xf32> to vector<8x1x32xf32>
    %80 = vector.broadcast %79 : vector<8x1x32xf32> to vector<8x16x32xf32>
    %81 = arith.addf %80, %9 : vector<8x16x32xf32>
    %82 = math.tanh %81 : vector<8x16x32xf32>
    %83 = vector.shape_cast %82 : vector<8x16x32xf32> to vector<128x32xf32>
    %c0_42 = arith.constant 0 : index
    %c0_43 = arith.constant 0 : index
    %84 = vector.load %arg10[%c0_42, %c0_43] : memref<32x1xf32, #tpu.memory_space<vmem>>, vector<32x1xf32>
    %cst_44 = arith.constant dense<0.000000e+00> : vector<128x1xf32>
    %85 = tpu.matmul %83, %84, %cst_44 {dimension_numbers = #tpu.dot_dimension_numbers<[1], [0], [0], [1], [0, 0, 1, 1], [], []>} : vector<128x32xf32>, vector<32x1xf32>, vector<128x1xf32> -> vector<128x1xf32>
    %86 = vector.shape_cast %85 : vector<128x1xf32> to vector<8x16x1xf32>
    %cst_45 = arith.constant dense<0xFF800000> : vector<8x1xf32>
    %87 = vector.multi_reduction <maximumf>, %86, %cst_45 [1] : vector<8x16x1xf32> to vector<8x1xf32>
    %88 = vector.shape_cast %87 : vector<8x1xf32> to vector<8x1x1xf32>
    %89 = vector.broadcast %88 : vector<8x1x1xf32> to vector<8x16x1xf32>
    %90 = arith.subf %86, %89 : vector<8x16x1xf32>
    %91 = math.exp %90 : vector<8x16x1xf32>
    %cst_46 = arith.constant dense<0.000000e+00> : vector<8x1xf32>
    %92 = vector.multi_reduction <add>, %91, %cst_46 [1] : vector<8x16x1xf32> to vector<8x1xf32>
    %93 = vector.shape_cast %92 : vector<8x1xf32> to vector<8x1x1xf32>
    %94 = tpu.reciprocal %93 {approx = true} : vector<8x1x1xf32> -> vector<8x1x1xf32>
    %95 = vector.broadcast %94 : vector<8x1x1xf32> to vector<8x16x1xf32>
    %96 = arith.mulf %91, %95 : vector<8x16x1xf32>
    %97 = vector.broadcast %96 : vector<8x16x1xf32> to vector<8x16x32xf32>
    %98 = arith.mulf %97, %9 : vector<8x16x32xf32>
    %cst_47 = arith.constant dense<0.000000e+00> : vector<8x32xf32>
    %99 = vector.multi_reduction <add>, %98, %cst_47 [1] : vector<8x16x32xf32> to vector<8x32xf32>
    %c0_48 = arith.constant 0 : index
    %c0_49 = arith.constant 0 : index
    %100 = vector.load %arg11[%c0_48, %c0_49] : memref<32x1xf32, #tpu.memory_space<vmem>>, vector<32x1xf32>
    %cst_50 = arith.constant dense<0.000000e+00> : vector<8x1xf32>
    %101 = tpu.matmul %78, %100, %cst_50 {dimension_numbers = #tpu.dot_dimension_numbers<[1], [0], [0], [1], [0, 0, 1, 1], [], []>} : vector<8x32xf32>, vector<32x1xf32>, vector<8x1xf32> -> vector<8x1xf32>
    %c0_51 = arith.constant 0 : index
    %c0_52 = arith.constant 0 : index
    %102 = vector.load %arg12[%c0_51, %c0_52] : memref<32x1xf32, #tpu.memory_space<vmem>>, vector<32x1xf32>
    %cst_53 = arith.constant dense<0.000000e+00> : vector<8x1xf32>
    %103 = tpu.matmul %99, %102, %cst_53 {dimension_numbers = #tpu.dot_dimension_numbers<[1], [0], [0], [1], [0, 0, 1, 1], [], []>} : vector<8x32xf32>, vector<32x1xf32>, vector<8x1xf32> -> vector<8x1xf32>
    %104 = arith.addf %101, %103 : vector<8x1xf32>
    %c0_54 = arith.constant 0 : index
    %c0_55 = arith.constant 0 : index
    %105 = memref.load %arg13[%c0_54, %c0_55] : memref<1x1xf32, #tpu.memory_space<smem>>
    %106 = vector.broadcast %105 : f32 to vector<8x1xf32>
    %107 = arith.addf %104, %106 : vector<8x1xf32>
    %108 = vector.shape_cast %107 : vector<8x1xf32> to vector<8x1xf32>
    %109 = vector.broadcast %108 : vector<8x1xf32> to vector<8x128xf32>
    %c0_56 = arith.constant 0 : index
    %c0_57 = arith.constant 0 : index
    %110 = vector.load %arg14[%c0_56, %c0_57] : memref<8x128xf32, #tpu.memory_space<vmem>>, vector<8x128xf32>
    tpu.vector_store %arg14[%c0_56, %c0_57], %109 {strides = array<i32>} : memref<8x128xf32, #tpu.memory_space<vmem>>, vector<8x128xf32>,
    return
  }
  func.func @transform_0(%arg0: i32) -> (i32, i32) {
    %c0_i32 = arith.constant 0 : i32
    %c0_i32_0 = arith.constant 0 : i32
    return %arg0, %c0_i32 : i32, i32
  }
  func.func @transform_1(%arg0: i32) -> (i32, i32, i32) {
    %c0_i32 = arith.constant 0 : i32
    %c0_i32_0 = arith.constant 0 : i32
    %c0_i32_1 = arith.constant 0 : i32
    return %c0_i32, %arg0, %c0_i32_0 : i32, i32, i32
  }
  func.func @transform_2(%arg0: i32) -> (i32, i32) {
    %c0_i32 = arith.constant 0 : i32
    %c0_i32_0 = arith.constant 0 : i32
    return %arg0, %c0_i32 : i32, i32
  }
  func.func @transform_3(%arg0: i32) -> (i32, i32, i32) {
    %c0_i32 = arith.constant 0 : i32
    %c0_i32_0 = arith.constant 0 : i32
    %c0_i32_1 = arith.constant 0 : i32
    return %arg0, %c0_i32, %c0_i32_0 : i32, i32, i32
  }
  func.func @transform_4(%arg0: i32) -> (i32, i32) {
    %c0_i32 = arith.constant 0 : i32
    %c0_i32_0 = arith.constant 0 : i32
    %c0_i32_1 = arith.constant 0 : i32
    return %c0_i32, %c0_i32_0 : i32, i32
  }
  func.func @transform_5(%arg0: i32) -> (i32, i32) {
    %c0_i32 = arith.constant 0 : i32
    %c0_i32_0 = arith.constant 0 : i32
    %c0_i32_1 = arith.constant 0 : i32
    return %c0_i32, %c0_i32_0 : i32, i32
  }
  func.func @transform_6(%arg0: i32) -> (i32, i32) {
    %c0_i32 = arith.constant 0 : i32
    %c0_i32_0 = arith.constant 0 : i32
    %c0_i32_1 = arith.constant 0 : i32
    return %c0_i32, %c0_i32_0 : i32, i32
  }
  func.func @transform_7(%arg0: i32) -> (i32, i32) {
    %c0_i32 = arith.constant 0 : i32
    %c0_i32_0 = arith.constant 0 : i32
    %c0_i32_1 = arith.constant 0 : i32
    return %c0_i32, %c0_i32_0 : i32, i32
  }
  func.func @transform_8(%arg0: i32) -> (i32, i32) {
    %c0_i32 = arith.constant 0 : i32
    %c0_i32_0 = arith.constant 0 : i32
    %c0_i32_1 = arith.constant 0 : i32
    return %c0_i32, %c0_i32_0 : i32, i32
  }
  func.func @transform_9(%arg0: i32) -> (i32, i32) {
    %c0_i32 = arith.constant 0 : i32
    %c0_i32_0 = arith.constant 0 : i32
    %c0_i32_1 = arith.constant 0 : i32
    return %c0_i32, %c0_i32_0 : i32, i32
  }
  func.func @transform_10(%arg0: i32) -> (i32, i32) {
    %c0_i32 = arith.constant 0 : i32
    %c0_i32_0 = arith.constant 0 : i32
    %c0_i32_1 = arith.constant 0 : i32
    return %c0_i32, %c0_i32_0 : i32, i32
  }
  func.func @transform_11(%arg0: i32) -> (i32, i32) {
    %c0_i32 = arith.constant 0 : i32
    %c0_i32_0 = arith.constant 0 : i32
    %c0_i32_1 = arith.constant 0 : i32
    return %c0_i32, %c0_i32_0 : i32, i32
  }
  func.func @transform_12(%arg0: i32) -> (i32, i32) {
    %c0_i32 = arith.constant 0 : i32
    %c0_i32_0 = arith.constant 0 : i32
    %c0_i32_1 = arith.constant 0 : i32
    return %c0_i32, %c0_i32_0 : i32, i32
  }
  func.func @transform_13(%arg0: i32) -> (i32, i32) {
    %c0_i32 = arith.constant 0 : i32
    %c0_i32_0 = arith.constant 0 : i32
    return %arg0, %c0_i32 : i32, i32
  }
}

</mosaic_0001>

<llo_original>
// kernel: _forward_impl.1
$region0: #{_forward_impl.1}
  #allocation0 [shape = 'u32[]', space=smem, size = 0x4, offset = 0x4, fixed_abs, tag = 'smem constant byte address 0x4 - core index']
  #allocation1 [shape = 'u32[144,128]{1,0:T(1,128)}', space=vmem, size = 0x12000, scoped, tag = 'internal scratch']
  #allocation2 [shape = 'f32[1,1]{1,0:T(1,128)S(6)}', space=smem, size = 0x200, scoped, tag = 'scoped memory for _forward_impl.1']
  %s0 = inlined_call_operand.vmem [shape: s32[8,1], index: 0, kind: input, shape index: {}]
  %s1 = inlined_call_operand.vmem [shape: bf16[8,8,32], index: 1, kind: input, shape index: {}]
  %s2 = inlined_call_operand.vmem [shape: bf16[8,32], index: 2, kind: input, shape index: {}]
  %s3 = inlined_call_operand.vmem [shape: bf16[8,16,32], index: 3, kind: input, shape index: {}]
  %s4 = inlined_call_operand.vmem [shape: bf16[32,32], index: 4, kind: input, shape index: {}]
  %s5 = inlined_call_operand.vmem [shape: bf16[32,32], index: 5, kind: input, shape index: {}]
  %s6 = inlined_call_operand.vmem [shape: bf16[32,32], index: 6, kind: input, shape index: {}]
  %s7 = inlined_call_operand.vmem [shape: bf16[32,32], index: 7, kind: input, shape index: {}]
  %s8 = inlined_call_operand.vmem [shape: f32[32,1], index: 8, kind: input, shape index: {}]
  %s9 = inlined_call_operand.vmem [shape: f32[32,1], index: 9, kind: input, shape index: {}]
  %s10 = inlined_call_operand.vmem [shape: f32[32,1], index: 10, kind: input, shape index: {}]
  %s11 = inlined_call_operand.vmem [shape: f32[32,1], index: 11, kind: input, shape index: {}]
  %s12 = inlined_call_operand.<no memory space> [shape: f32[1,1], index: 12, kind: input, shape index: {}]
  %s13 = inlined_call_operand.vmem [shape: f32[8,128], index: 13, kind: output, shape index: {}]
  %s14 = sld [smem:[#allocation0]]
  $region62: #{_forward_impl.1} parent=0
    _
  %s16 = ssub.s32 1, %s14
  %s17 = scalar_select 0, %s16, %s14
  %18 = sst [smem:[#allocation2]] %s12
  // Predicated region
  $region2: #{_forward_impl.1} parent=0 // pred_check
    _
  $region3: #{_forward_impl.1} parent=0 // pred_check_branch
    %20 = sbr.rel (0) target = $region5
  $region4: #{_forward_impl.1} parent=0 // pred_region
    _
  $region5: #{_forward_impl.1} parent=0 // pred_fallthru
    _
  // Predicated region
  $region6: #{_forward_impl.1} parent=0 // pred_check
    _
  $region7: #{_forward_impl.1} parent=0 // pred_check_branch
    %22 = sbr.rel (0) target = $region9
  $region8: #{_forward_impl.1} parent=0 // pred_region
    _
  $region9: #{_forward_impl.1} parent=0 // pred_fallthru
    _
  // Predicated region
  $region10: #{_forward_impl.1} parent=0 // pred_check
    _
  $region11: #{_forward_impl.1} parent=0 // pred_check_branch
    %24 = sbr.rel (0) target = $region13
  $region12: #{_forward_impl.1} parent=0 // pred_region
    _
  $region13: #{_forward_impl.1} parent=0 // pred_fallthru
    _
  // Predicated region
  $region14: #{_forward_impl.1} parent=0 // pred_check
    _
  $region15: #{_forward_impl.1} parent=0 // pred_check_branch
    %26 = sbr.rel (0) target = $region17
  $region16: #{_forward_impl.1} parent=0 // pred_region
    _
  $region17: #{_forward_impl.1} parent=0 // pred_fallthru
    _
  // Predicated region
  $region18: #{_forward_impl.1} parent=0 // pred_check
    _
  $region19: #{_forward_impl.1} parent=0 // pred_check_branch
    %28 = sbr.rel (0) target = $region21
  $region20: #{_forward_impl.1} parent=0 // pred_region
    _
  $region21: #{_forward_impl.1} parent=0 // pred_fallthru
    _
  // Predicated region
  $region22: #{_forward_impl.1} parent=0 // pred_check
    _
  $region23: #{_forward_impl.1} parent=0 // pred_check_branch
    %30 = sbr.rel (0) target = $region25
  $region24: #{_forward_impl.1} parent=0 // pred_region
    _
  $region25: #{_forward_impl.1} parent=0 // pred_fallthru
    _
  // Predicated region
  $region26: #{_forward_impl.1} parent=0 // pred_check
    _
  $region27: #{_forward_impl.1} parent=0 // pred_check_branch
    %32 = sbr.rel (0) target = $region29
  $region28: #{_forward_impl.1} parent=0 // pred_region
    _
  $region29: #{_forward_impl.1} parent=0 // pred_fallthru
    _
  // Predicated region
  $region30: #{_forward_impl.1} parent=0 // pred_check
    _
  $region31: #{_forward_impl.1} parent=0 // pred_check_branch
    %34 = sbr.rel (0) target = $region33
  $region32: #{_forward_impl.1} parent=0 // pred_region
    _
  $region33: #{_forward_impl.1} parent=0 // pred_fallthru
    _
  // Predicated region
  $region34: #{_forward_impl.1} parent=0 // pred_check
    _
  $region35: #{_forward_impl.1} parent=0 // pred_check_branch
    %36 = sbr.rel (0) target = $region37
  $region36: #{_forward_impl.1} parent=0 // pred_region
    _
  $region37: #{_forward_impl.1} parent=0 // pred_fallthru
    _
  // Predicated region
  $region38: #{_forward_impl.1} parent=0 // pred_check
    _
  $region39: #{_forward_impl.1} parent=0 // pred_check_branch
    %38 = sbr.rel (0) target = $region41
  $region40: #{_forward_impl.1} parent=0 // pred_region
    _
  $region41: #{_forward_impl.1} parent=0 // pred_fallthru
    _
  // Predicated region
  $region42: #{_forward_impl.1} parent=0 // pred_check
    _
  $region43: #{_forward_impl.1} parent=0 // pred_check_branch
    %40 = sbr.rel (0) target = $region45
  $region44: #{_forward_impl.1} parent=0 // pred_region
    _
  $region45: #{_forward_impl.1} parent=0 // pred_fallthru
    _
  // Predicated region
  $region46: #{_forward_impl.1} parent=0 // pred_check
    _
  $region47: #{_forward_impl.1} parent=0 // pred_check_branch
    %42 = sbr.rel (0) target = $region49
  $region48: #{_forward_impl.1} parent=0 // pred_region
    _
  $region49: #{_forward_impl.1} parent=0 // pred_fallthru
    _
  // Predicated region
  $region50: #{_forward_impl.1} parent=0 // pred_check
    _
  $region51: #{_forward_impl.1} parent=0 // pred_check_branch
    %44 = sbr.rel (0) target = $region53
  $region52: #{_forward_impl.1} parent=0 // pred_region
    _
  $region53: #{_forward_impl.1} parent=0 // pred_fallthru
    _
  %v46 = vld [vmem:[%s1] sm:$0xf]
  %v47 = vld [vmem:[%s1 + $0x4] sm:$0xf]
  %v48 = vld [vmem:[%s1 + $0x8] sm:$0xf]
  %v49 = vld [vmem:[%s1 + $0xc] sm:$0xf]
  %v50 = vld [vmem:[%s1 + $0x10] sm:$0xf]
  %v51 = vld [vmem:[%s1 + $0x14] sm:$0xf]
  %v52 = vld [vmem:[%s1 + $0x18] sm:$0xf]
  %v53 = vld [vmem:[%s1 + $0x1c] sm:$0xf]
  %v54 = vld [vmem:[%s4] sm:$0xf]
  %v55 = vld [vmem:[%s4 + $0x4] sm:$0xf]
  %v56 = vld [vmem:[%s4 + $0x8] sm:$0xf]
  %v57 = vld [vmem:[%s4 + $0xc] sm:$0xf]
  %v66 = vunpack.c.l.b16 %v46
  %v67 = vunpack.c.l.b16 %v47
  %v68 = vunpack.c.l.b16 %v48
  %v69 = vunpack.c.l.b16 %v49
  %v70 = vunpack.c.l.b16 %v50
  %v71 = vunpack.c.l.b16 %v51
  %v72 = vunpack.c.l.b16 %v52
  %v73 = vunpack.c.l.b16 %v53
  %v74 = vpack.c.b16 %v67, %v66
  %v75 = vpack.c.b16 %v69, %v68
  %v76 = vpack.c.b16 %v71, %v70
  %v77 = vpack.c.b16 %v73, %v72
  %v82 = vunpack.c.l.b16 %v54
  %v83 = vunpack.c.l.b16 %v55
  %v84 = vunpack.c.l.b16 %v56
  %v85 = vunpack.c.l.b16 %v57
  %v86 = vpack.c.b16 %v83, %v82
  %v87 = vpack.c.b16 %v85, %v84
  %vm90 = vcmask 261120
  %v92 = vsel %vm90, %v74, 0
  %v95 = vsel %vm90, %v75, 0
  %v98 = vsel %vm90, %v76, 0
  %v101 = vsel %vm90, %v77, 0
  %103 = vmatprep.subr.bf16.mxu0 0
  %104 = vmatpush1.bf16.msra.mxu0 0
  %105 = vmatprep.subr.bf16.mxu0 0
  %106 = vmatpush1.bf16.msra.mxu0 0
  %107 = vmatprep.subr.bf16.mxu0 0
  %108 = vmatpush1.bf16.msra.mxu0 0
  %109 = vmatprep.subr.bf16.mxu0 0
  %110 = vmatpush1.bf16.msra.mxu0 0
  %111 = vmatprep.subr.bf16.mxu0 0
  %112 = vmatpush1.bf16.msra.mxu0 0
  %113 = vmatprep.subr.bf16.mxu0 0
  %114 = vmatpush1.bf16.msra.mxu0 0
  %115 = vmatprep.subr.bf16.mxu0 0
  %116 = vmatpush1.bf16.msra.mxu0 %v87
  %117 = vmatprep.subr.bf16.mxu0 0
  %118 = vmatpush1.bf16.msra.mxu0 %v86
  %119 = vmatprep.subr.bf16.mxu0 0
  %120 = vmatpush2.bf16.msra.mxu0 0
  %121 = vmatprep.subr.bf16.mxu0 0
  %122 = vmatpush2.bf16.msra.mxu0 0
  %123 = vmatprep.subr.bf16.mxu0 0
  %124 = vmatpush2.bf16.msra.mxu0 0
  %125 = vmatprep.subr.bf16.mxu0 0
  %126 = vmatpush2.bf16.msra.mxu0 0
  %127 = vmatprep.subr.bf16.mxu0 0
  %128 = vmatpush2.bf16.msra.mxu0 0
  %129 = vmatprep.subr.bf16.mxu0 0
  %130 = vmatpush2.bf16.msra.mxu0 0
  %131 = vmatprep.subr.bf16.mxu0 0
  %132 = vmatpush2.bf16.msra.mxu0 0
  %133 = vmatprep.subr.bf16.mxu0 0
  %134 = vmatpush2.bf16.msra.mxu0 0
  %135 = vmatprep.mubr.bf16.mxu0 0
  %136 = vmatmul.mubr.bf16.gmra.mxu0 %v92
  %v137 = vpop.f32.mrf.mxu0
  %v138 = vadd.f32 0.0, %v137
  %v139 = vpop.f32.mrf.mxu0
  %v140 = vpop.f32.mrf.mxu0
  %v141 = vadd.f32 0.0, %v140
  %v142 = vpop.f32.mrf.mxu0
  %143 = vmatprep.mubr.bf16.mxu0 0
  %144 = vmatmul.mubr.bf16.gmra.mxu0 %v95
  %v145 = vpop.f32.mrf.mxu0
  %v146 = vadd.f32 0.0, %v145
  %v147 = vpop.f32.mrf.mxu0
  %v148 = vpop.f32.mrf.mxu0
  %v149 = vadd.f32 0.0, %v148
  %v150 = vpop.f32.mrf.mxu0
  %151 = vmatprep.mubr.bf16.mxu0 0
  %152 = vmatmul.mubr.bf16.gmra.mxu0 %v98
  %v153 = vpop.f32.mrf.mxu0
  %v154 = vadd.f32 0.0, %v153
  %v155 = vpop.f32.mrf.mxu0
  %v156 = vpop.f32.mrf.mxu0
  %v157 = vadd.f32 0.0, %v156
  %v158 = vpop.f32.mrf.mxu0
  %159 = vmatprep.mubr.bf16.mxu0 0
  %160 = vmatmul.mubr.bf16.gmra.mxu0 %v101
  %v161 = vpop.f32.mrf.mxu0
  %v162 = vadd.f32 0.0, %v161
  %v163 = vpop.f32.mrf.mxu0
  %v164 = vpop.f32.mrf.mxu0
  %v165 = vadd.f32 0.0, %v164
  %v166 = vpop.f32.mrf.mxu0
  %167 = vdwg.mxu0
  %v168 = vld [vmem:[%s3] sm:$0xf]
  %v169 = vld [vmem:[%s3 + $0x4] sm:$0xf]
  %v170 = vld [vmem:[%s3 + $0x8] sm:$0xf]
  %v171 = vld [vmem:[%s3 + $0xc] sm:$0xf]
  %v172 = vld [vmem:[%s3 + $0x10] sm:$0xf]
  %v173 = vld [vmem:[%s3 + $0x14] sm:$0xf]
  %v174 = vld [vmem:[%s3 + $0x18] sm:$0xf]
  %v175 = vld [vmem:[%s3 + $0x1c] sm:$0xf]
  %v176 = vld [vmem:[%s3 + $0x20] sm:$0xf]
  %v177 = vld [vmem:[%s3 + $0x24] sm:$0xf]
  %v178 = vld [vmem:[%s3 + $0x28] sm:$0xf]
  %v179 = vld [vmem:[%s3 + $0x2c] sm:$0xf]
  %v180 = vld [vmem:[%s3 + $0x30] sm:$0xf]
  %v181 = vld [vmem:[%s3 + $0x34] sm:$0xf]
  %v182 = vld [vmem:[%s3 + $0x38] sm:$0xf]
  %v183 = vld [vmem:[%s3 + $0x3c] sm:$0xf]
  %v184 = vld [vmem:[%s5] sm:$0xf]
  %v185 = vld [vmem:[%s5 + $0x4] sm:$0xf]
  %v186 = vld [vmem:[%s5 + $0x8] sm:$0xf]
  %v187 = vld [vmem:[%s5 + $0xc] sm:$0xf]
  %v204 = vunpack.c.l.b16 %v168
  %v205 = vunpack.c.l.b16 %v169
  %v206 = vunpack.c.l.b16 %v170
  %v207 = vunpack.c.l.b16 %v171
  %v208 = vunpack.c.l.b16 %v172
  %v209 = vunpack.c.l.b16 %v173
  %v210 = vunpack.c.l.b16 %v174
  %v211 = vunpack.c.l.b16 %v175
  %v212 = vunpack.c.l.b16 %v176
  %v213 = vunpack.c.l.b16 %v177
  %v214 = vunpack.c.l.b16 %v178
  %v215 = vunpack.c.l.b16 %v179
  %v216 = vunpack.c.l.b16 %v180
  %v217 = vunpack.c.l.b16 %v181
  %v218 = vunpack.c.l.b16 %v182
  %v219 = vunpack.c.l.b16 %v183
  %v220 = vpack.c.b16 %v205, %v204
  %v221 = vpack.c.b16 %v207, %v206
  %v222 = vpack.c.b16 %v209, %v208
  %v223 = vpack.c.b16 %v211, %v210
  %v224 = vpack.c.b16 %v213, %v212
  %v225 = vpack.c.b16 %v215, %v214
  %v226 = vpack.c.b16 %v217, %v216
  %v227 = vpack.c.b16 %v219, %v218
  %v232 = vunpack.c.l.b16 %v184
  %v233 = vunpack.c.l.b16 %v185
  %v234 = vunpack.c.l.b16 %v186
  %v235 = vunpack.c.l.b16 %v187
  %v236 = vpack.c.b16 %v233, %v232
  %v237 = vpack.c.b16 %v235, %v234
  %v241 = vsel %vm90, %v220, 0
  %v244 = vsel %vm90, %v221, 0
  %v247 = vsel %vm90, %v222, 0
  %v250 = vsel %vm90, %v223, 0
  %v253 = vsel %vm90, %v224, 0
  %v256 = vsel %vm90, %v225, 0
  %v259 = vsel %vm90, %v226, 0
  %v262 = vsel %vm90, %v227, 0
  %264 = vmatprep.subr.bf16.mxu0 0
  %265 = vmatpush1.bf16.msra.mxu0 0
  %266 = vmatprep.subr.bf16.mxu0 0
  %267 = vmatpush1.bf16.msra.mxu0 0
  %268 = vmatprep.subr.bf16.mxu0 0
  %269 = vmatpush1.bf16.msra.mxu0 0
  %270 = vmatprep.subr.bf16.mxu0 0
  %271 = vmatpush1.bf16.msra.mxu0 0
  %272 = vmatprep.subr.bf16.mxu0 0
  %273 = vmatpush1.bf16.msra.mxu0 0
  %274 = vmatprep.subr.bf16.mxu0 0
  %275 = vmatpush1.bf16.msra.mxu0 0
  %276 = vmatprep.subr.bf16.mxu0 0
  %277 = vmatpush1.bf16.msra.mxu0 %v237
  %278 = vmatprep.subr.bf16.mxu0 0
  %279 = vmatpush1.bf16.msra.mxu0 %v236
  %280 = vmatprep.subr.bf16.mxu0 0
  %281 = vmatpush2.bf16.msra.mxu0 0
  %282 = vmatprep.subr.bf16.mxu0 0
  %283 = vmatpush2.bf16.msra.mxu0 0
  %284 = vmatprep.subr.bf16.mxu0 0
  %285 = vmatpush2.bf16.msra.mxu0 0
  %286 = vmatprep.subr.bf16.mxu0 0
  %287 = vmatpush2.bf16.msra.mxu0 0
  %288 = vmatprep.subr.bf16.mxu0 0
  %289 = vmatpush2.bf16.msra.mxu0 0
  %290 = vmatprep.subr.bf16.mxu0 0
  %291 = vmatpush2.bf16.msra.mxu0 0
  %292 = vmatprep.subr.bf16.mxu0 0
  %293 = vmatpush2.bf16.msra.mxu0 0
  %294 = vmatprep.subr.bf16.mxu0 0
  %295 = vmatpush2.bf16.msra.mxu0 0
  %296 = vmatprep.mubr.bf16.mxu0 0
  %297 = vmatmul.mubr.bf16.gmra.mxu0 %v241
  %v298 = vpop.f32.mrf.mxu0
  %v299 = vadd.f32 0.0, %v298
  %v300 = vpop.f32.mrf.mxu0
  %v301 = vpop.f32.mrf.mxu0
  %v302 = vadd.f32 0.0, %v301
  %v303 = vpop.f32.mrf.mxu0
  %304 = vmatprep.mubr.bf16.mxu0 0
  %305 = vmatmul.mubr.bf16.gmra.mxu0 %v244
  %v306 = vpop.f32.mrf.mxu0
  %v307 = vadd.f32 0.0, %v306
  %v308 = vpop.f32.mrf.mxu0
  %v309 = vpop.f32.mrf.mxu0
  %v310 = vadd.f32 0.0, %v309
  %v311 = vpop.f32.mrf.mxu0
  %312 = vmatprep.mubr.bf16.mxu0 0
  %313 = vmatmul.mubr.bf16.gmra.mxu0 %v247
  %v314 = vpop.f32.mrf.mxu0
  %v315 = vadd.f32 0.0, %v314
  %v316 = vpop.f32.mrf.mxu0
  %v317 = vpop.f32.mrf.mxu0
  %v318 = vadd.f32 0.0, %v317
  %v319 = vpop.f32.mrf.mxu0
  %320 = vmatprep.mubr.bf16.mxu0 0
  %321 = vmatmul.mubr.bf16.gmra.mxu0 %v250
  %v322 = vpop.f32.mrf.mxu0
  %v323 = vadd.f32 0.0, %v322
  %v324 = vpop.f32.mrf.mxu0
  %v325 = vpop.f32.mrf.mxu0
  %v326 = vadd.f32 0.0, %v325
  %v327 = vpop.f32.mrf.mxu0
  %328 = vmatprep.mubr.bf16.mxu0 0
  %329 = vmatmul.mubr.bf16.gmra.mxu0 %v253
  %v330 = vpop.f32.mrf.mxu0
  %v331 = vadd.f32 0.0, %v330
  %v332 = vpop.f32.mrf.mxu0
  %v333 = vpop.f32.mrf.mxu0
  %v334 = vadd.f32 0.0, %v333
  %v335 = vpop.f32.mrf.mxu0
  %336 = vmatprep.mubr.bf16.mxu0 0
  %337 = vmatmul.mubr.bf16.gmra.mxu0 %v256
  %v338 = vpop.f32.mrf.mxu0
  %v339 = vadd.f32 0.0, %v338
  %v340 = vpop.f32.mrf.mxu0
  %v341 = vpop.f32.mrf.mxu0
  %v342 = vadd.f32 0.0, %v341
  %v343 = vpop.f32.mrf.mxu0
  %344 = vmatprep.mubr.bf16.mxu0 0
  %345 = vmatmul.mubr.bf16.gmra.mxu0 %v259
  %v346 = vpop.f32.mrf.mxu0
  %v347 = vadd.f32 0.0, %v346
  %v348 = vpop.f32.mrf.mxu0
  %v349 = vpop.f32.mrf.mxu0
  %v350 = vadd.f32 0.0, %v349
  %v351 = vpop.f32.mrf.mxu0
  %352 = vmatprep.mubr.bf16.mxu0 0
  %353 = vmatmul.mubr.bf16.gmra.mxu0 %v262
  %v354 = vpop.f32.mrf.mxu0
  %v355 = vadd.f32 0.0, %v354
  %v356 = vpop.f32.mrf.mxu0
  %v357 = vpop.f32.mrf.mxu0
  %v358 = vadd.f32 0.0, %v357
  %v359 = vpop.f32.mrf.mxu0
  %360 = vdwg.mxu0
  %v361 = vld [vmem:[%s2] sm:$0xf]
  %v362 = vld [vmem:[%s6] sm:$0xf]
  %v363 = vld [vmem:[%s6 + $0x4] sm:$0xf]
  %v364 = vld [vmem:[%s6 + $0x8] sm:$0xf]
  %v365 = vld [vmem:[%s6 + $0xc] sm:$0xf]
  %v370 = vunpack.c.l.b16 %v362
  %v371 = vunpack.c.l.b16 %v363
  %v372 = vunpack.c.l.b16 %v364
  %v373 = vunpack.c.l.b16 %v365
  %v374 = vpack.c.b16 %v371, %v370
  %v375 = vpack.c.b16 %v373, %v372
  %v379 = vsel %vm90, %v361, 0
  %381 = vmatprep.subr.bf16.mxu0 0
  %382 = vmatpush1.bf16.msra.mxu0 0
  %383 = vmatprep.subr.bf16.mxu0 0
  %384 = vmatpush1.bf16.msra.mxu0 0
  %385 = vmatprep.subr.bf16.mxu0 0
  %386 = vmatpush1.bf16.msra.mxu0 0
  %387 = vmatprep.subr.bf16.mxu0 0
  %388 = vmatpush1.bf16.msra.mxu0 0
  %389 = vmatprep.subr.bf16.mxu0 0
  %390 = vmatpush1.bf16.msra.mxu0 0
  %391 = vmatprep.subr.bf16.mxu0 0
  %392 = vmatpush1.bf16.msra.mxu0 0
  %393 = vmatprep.subr.bf16.mxu0 0
  %394 = vmatpush1.bf16.msra.mxu0 %v375
  %395 = vmatprep.subr.bf16.mxu0 0
  %396 = vmatpush1.bf16.msra.mxu0 %v374
  %397 = vmatprep.subr.bf16.mxu0 0
  %398 = vmatpush2.bf16.msra.mxu0 0
  %399 = vmatprep.subr.bf16.mxu0 0
  %400 = vmatpush2.bf16.msra.mxu0 0
  %401 = vmatprep.subr.bf16.mxu0 0
  %402 = vmatpush2.bf16.msra.mxu0 0
  %403 = vmatprep.subr.bf16.mxu0 0
  %404 = vmatpush2.bf16.msra.mxu0 0
  %405 = vmatprep.subr.bf16.mxu0 0
  %406 = vmatpush2.bf16.msra.mxu0 0
  %407 = vmatprep.subr.bf16.mxu0 0
  %408 = vmatpush2.bf16.msra.mxu0 0
  %409 = vmatprep.subr.bf16.mxu0 0
  %410 = vmatpush2.bf16.msra.mxu0 0
  %411 = vmatprep.subr.bf16.mxu0 0
  %412 = vmatpush2.bf16.msra.mxu0 0
  %413 = vmatprep.mubr.bf16.mxu0 0
  %414 = vmatmul.mubr.bf16.gmra.mxu0 %v379
  %v415 = vpop.f32.mrf.mxu0
  %v416 = vadd.f32 0.0, %v415
  %v417 = vpop.f32.mrf.mxu0
  %v418 = vpop.f32.mrf.mxu0
  %v419 = vpop.f32.mrf.mxu0
  %420 = vdwg.mxu0
  %v421 = vld [vmem:[%s7] sm:$0xf]
  %v422 = vld [vmem:[%s7 + $0x4] sm:$0xf]
  %v423 = vld [vmem:[%s7 + $0x8] sm:$0xf]
  %v424 = vld [vmem:[%s7 + $0xc] sm:$0xf]
  %v429 = vunpack.c.l.b16 %v421
  %v430 = vunpack.c.l.b16 %v422
  %v431 = vunpack.c.l.b16 %v423
  %v432 = vunpack.c.l.b16 %v424
  %v433 = vpack.c.b16 %v430, %v429
  %v434 = vpack.c.b16 %v432, %v431
  %437 = vmatprep.subr.bf16.mxu0 0
  %438 = vmatpush1.bf16.msra.mxu0 0
  %439 = vmatprep.subr.bf16.mxu0 0
  %440 = vmatpush1.bf16.msra.mxu0 0
  %441 = vmatprep.subr.bf16.mxu0 0
  %442 = vmatpush1.bf16.msra.mxu0 0
  %443 = vmatprep.subr.bf16.mxu0 0
  %444 = vmatpush1.bf16.msra.mxu0 0
  %445 = vmatprep.subr.bf16.mxu0 0
  %446 = vmatpush1.bf16.msra.mxu0 0
  %447 = vmatprep.subr.bf16.mxu0 0
  %448 = vmatpush1.bf16.msra.mxu0 0
  %449 = vmatprep.subr.bf16.mxu0 0
  %450 = vmatpush1.bf16.msra.mxu0 %v434
  %451 = vmatprep.subr.bf16.mxu0 0
  %452 = vmatpush1.bf16.msra.mxu0 %v433
  %453 = vmatprep.subr.bf16.mxu0 0
  %454 = vmatpush2.bf16.msra.mxu0 0
  %455 = vmatprep.subr.bf16.mxu0 0
  %456 = vmatpush2.bf16.msra.mxu0 0
  %457 = vmatprep.subr.bf16.mxu0 0
  %458 = vmatpush2.bf16.msra.mxu0 0
  %459 = vmatprep.subr.bf16.mxu0 0
  %460 = vmatpush2.bf16.msra.mxu0 0
  %461 = vmatprep.subr.bf16.mxu0 0
  %462 = vmatpush2.bf16.msra.mxu0 0
  %463 = vmatprep.subr.bf16.mxu0 0
  %464 = vmatpush2.bf16.msra.mxu0 0
  %465 = vmatprep.subr.bf16.mxu0 0
  %466 = vmatpush2.bf16.msra.mxu0 0
  %467 = vmatprep.subr.bf16.mxu0 0
  %468 = vmatpush2.bf16.msra.mxu0 0
  %469 = vmatprep.mubr.bf16.mxu0 0
  %470 = vmatmul.mubr.bf16.gmra.mxu0 %v379
  %v471 = vpop.f32.mrf.mxu0
  %v472 = vadd.f32 0.0, %v471
  %v473 = vpop.f32.mrf.mxu0
  %v474 = vpop.f32.mrf.mxu0
  %v475 = vpop.f32.mrf.mxu0
  %476 = vdwg.mxu0
  %v477 = vadd.f32 %v416, %v138
  %v478 = vadd.f32 %v416, %v141
  %v479 = vadd.f32 %v416, %v146
  %v480 = vadd.f32 %v416, %v149
  %v481 = vadd.f32 %v416, %v154
  %v482 = vadd.f32 %v416, %v157
  %v483 = vadd.f32 %v416, %v162
  %v484 = vadd.f32 %v416, %v165
  %v485 = vtanh.pop %v477
  %v486 = vtanh.pop %v478
  %v487 = vtanh.pop %v479
  %v488 = vtanh.pop %v480
  %v489 = vtanh.pop %v481
  %v490 = vtanh.pop %v482
  %v491 = vtanh.pop %v483
  %v492 = vtanh.pop %v484
  %v493 = vld [vmem:[%s8] sm:$0xff]
  %v494 = vld [vmem:[%s8 + $0x8] sm:$0xff]
  %v495 = vld [vmem:[%s8 + $0x10] sm:$0xff]
  %v496 = vld [vmem:[%s8 + $0x18] sm:$0xff]
  %v497 = vld [vmem:[%s0] sm:$0xff]
  %vm498 = vcmp.gt.s32.totalorder %v497, 0
  %v499 = vsel %vm498, 0.0, -1e+30
  %vm500 = vcmp.gt.s32.totalorder %v497, 1
  %v501 = vsel %vm500, 0.0, -1e+30
  %vm502 = vcmp.gt.s32.totalorder %v497, 2
  %v503 = vsel %vm502, 0.0, -1e+30
  %vm504 = vcmp.gt.s32.totalorder %v497, 3
  %v505 = vsel %vm504, 0.0, -1e+30
  %vm506 = vcmp.gt.s32.totalorder %v497, 4
  %v507 = vsel %vm506, 0.0, -1e+30
  %vm508 = vcmp.gt.s32.totalorder %v497, 5
  %v509 = vsel %vm508, 0.0, -1e+30
  %vm510 = vcmp.gt.s32.totalorder %v497, 6
  %v511 = vsel %vm510, 0.0, -1e+30
  %vm512 = vcmp.gt.s32.totalorder %v497, 7
  %v513 = vsel %vm512, 0.0, -1e+30
  %v515 = vsel %vm90, %v485, 0
  %v518 = vsel %vm90, %v486, 0
  %v521 = vsel %vm90, %v487, 0
  %v524 = vsel %vm90, %v488, 0
  %v527 = vsel %vm90, %v489, 0
  %v530 = vsel %vm90, %v490, 0
  %v533 = vsel %vm90, %v491, 0
  %v536 = vsel %vm90, %v492, 0
  %538 = vmatprep.subr.mxu0 0.0
  %539 = vmatpush1.msra.mxu0 0.0
  %540 = vmatprep.subr.mxu0 0.0
  %541 = vmatpush1.msra.mxu0 0.0
  %542 = vmatprep.subr.mxu0 0.0
  %543 = vmatpush1.msra.mxu0 0.0
  %544 = vmatprep.subr.mxu0 0.0
  %545 = vmatpush1.msra.mxu0 0.0
  %546 = vmatprep.subr.mxu0 0.0
  %547 = vmatpush1.msra.mxu0 0.0
  %548 = vmatprep.subr.mxu0 0.0
  %549 = vmatpush1.msra.mxu0 0.0
  %550 = vmatprep.subr.mxu0 0.0
  %551 = vmatpush1.msra.mxu0 0.0
  %552 = vmatprep.subr.mxu0 0.0
  %553 = vmatpush1.msra.mxu0 0.0
  %554 = vmatprep.subr.mxu0 0.0
  %555 = vmatpush1.msra.mxu0 0.0
  %556 = vmatprep.subr.mxu0 0.0
  %557 = vmatpush1.msra.mxu0 0.0
  %558 = vmatprep.subr.mxu0 0.0
  %559 = vmatpush1.msra.mxu0 0.0
  %560 = vmatprep.subr.mxu0 0.0
  %561 = vmatpush1.msra.mxu0 0.0
  %562 = vmatprep.subr.mxu0 0.0
  %563 = vmatpush1.msra.mxu0 %v496
  %564 = vmatprep.subr.mxu0 0.0
  %565 = vmatpush1.msra.mxu0 %v495
  %566 = vmatprep.subr.mxu0 0.0
  %567 = vmatpush1.msra.mxu0 %v494
  %568 = vmatprep.subr.mxu0 0.0
  %569 = vmatpush1.msra.mxu0 %v493
  %570 = vmatprep.subr.mxu0 0.0
  %571 = vmatpush2.msra.mxu0 0.0
  %572 = vmatprep.subr.mxu0 0.0
  %573 = vmatpush2.msra.mxu0 0.0
  %574 = vmatprep.subr.mxu0 0.0
  %575 = vmatpush2.msra.mxu0 0.0
  %576 = vmatprep.subr.mxu0 0.0
  %577 = vmatpush2.msra.mxu0 0.0
  %578 = vmatprep.subr.mxu0 0.0
  %579 = vmatpush2.msra.mxu0 0.0
  %580 = vmatprep.subr.mxu0 0.0
  %581 = vmatpush2.msra.mxu0 0.0
  %582 = vmatprep.subr.mxu0 0.0
  %583 = vmatpush2.msra.mxu0 0.0
  %584 = vmatprep.subr.mxu0 0.0
  %585 = vmatpush2.msra.mxu0 0.0
  %586 = vmatprep.subr.mxu0 0.0
  %587 = vmatpush2.msra.mxu0 0.0
  %588 = vmatprep.subr.mxu0 0.0
  %589 = vmatpush2.msra.mxu0 0.0
  %590 = vmatprep.subr.mxu0 0.0
  %591 = vmatpush2.msra.mxu0 0.0
  %592 = vmatprep.subr.mxu0 0.0
  %593 = vmatpush2.msra.mxu0 0.0
  %594 = vmatprep.subr.mxu0 0.0
  %595 = vmatpush2.msra.mxu0 0.0
  %596 = vmatprep.subr.mxu0 0.0
  %597 = vmatpush2.msra.mxu0 0.0
  %598 = vmatprep.subr.mxu0 0.0
  %599 = vmatpush2.msra.mxu0 0.0
  %600 = vmatprep.subr.mxu0 0.0
  %601 = vmatpush2.msra.mxu0 0.0
  %602 = vmatprep.mubr.f32.mxu0 0.0
  %603 = vmatmul.mubr.f32.gmra.mxu0 %v515
  %v604 = vpop.f32.mrf.mxu0
  %v605 = vadd.f32 %v499, %v604
  %v606 = vpop.f32.mrf.mxu0
  %607 = vmatprep.mubr.f32.mxu0 0.0
  %608 = vmatmul.mubr.f32.gmra.mxu0 %v518
  %v609 = vpop.f32.mrf.mxu0
  %v610 = vadd.f32 %v501, %v609
  %v611 = vpop.f32.mrf.mxu0
  %612 = vmatprep.mubr.f32.mxu0 0.0
  %613 = vmatmul.mubr.f32.gmra.mxu0 %v521
  %v614 = vpop.f32.mrf.mxu0
  %v615 = vadd.f32 %v503, %v614
  %v616 = vpop.f32.mrf.mxu0
  %617 = vmatprep.mubr.f32.mxu0 0.0
  %618 = vmatmul.mubr.f32.gmra.mxu0 %v524
  %v619 = vpop.f32.mrf.mxu0
  %v620 = vadd.f32 %v505, %v619
  %v621 = vpop.f32.mrf.mxu0
  %622 = vmatprep.mubr.f32.mxu0 0.0
  %623 = vmatmul.mubr.f32.gmra.mxu0 %v527
  %v624 = vpop.f32.mrf.mxu0
  %v625 = vadd.f32 %v507, %v624
  %v626 = vpop.f32.mrf.mxu0
  %627 = vmatprep.mubr.f32.mxu0 0.0
  %628 = vmatmul.mubr.f32.gmra.mxu0 %v530
  %v629 = vpop.f32.mrf.mxu0
  %v630 = vadd.f32 %v509, %v629
  %v631 = vpop.f32.mrf.mxu0
  %632 = vmatprep.mubr.f32.mxu0 0.0
  %633 = vmatmul.mubr.f32.gmra.mxu0 %v533
  %v634 = vpop.f32.mrf.mxu0
  %v635 = vadd.f32 %v511, %v634
  %v636 = vpop.f32.mrf.mxu0
  %637 = vmatprep.mubr.f32.mxu0 0.0
  %638 = vmatmul.mubr.f32.gmra.mxu0 %v536
  %v639 = vpop.f32.mrf.mxu0
  %v640 = vadd.f32 %v513, %v639
  %v641 = vpop.f32.mrf.mxu0
  %642 = vdwg.mxu0
  %vm643 = vcmask 7168
  %v644 = vsel %vm643, %v605, -inf
  %v645 = vsel %vm643, %v610, -inf
  %v646 = vsel %vm643, %v615, -inf
  %v647 = vsel %vm643, %v620, -inf
  %v648 = vsel %vm643, %v625, -inf
  %v649 = vmax.f32 %v644, %v648
  %v650 = vsel %vm643, %v630, -inf
  %v651 = vmax.f32 %v645, %v650
  %v652 = vsel %vm643, %v635, -inf
  %v653 = vmax.f32 %v646, %v652
  %v654 = vsel %vm643, %v640, -inf
  %v655 = vmax.f32 %v647, %v654
  %v656 = vmax.f32 %v649, %v651
  %v657 = vmax.f32 %v653, %v655
  %v658 = vmax.f32 %v656, %v657
  %v659 = vsub.f32 %v605, %v658
  %v660 = vsub.f32 %v610, %v658
  %v661 = vsub.f32 %v615, %v658
  %v662 = vsub.f32 %v620, %v658
  %v663 = vsub.f32 %v625, %v658
  %v664 = vsub.f32 %v630, %v658
  %v665 = vsub.f32 %v635, %v658
  %v666 = vsub.f32 %v640, %v658
  %v667 = vmul.f32 %v659, 1.442695
  %v668 = vpow.pop %v667
  %v669 = vmul.f32 %v660, 1.442695
  %v670 = vpow.pop %v669
  %v671 = vmul.f32 %v661, 1.442695
  %v672 = vpow.pop %v671
  %v673 = vmul.f32 %v662, 1.442695
  %v674 = vpow.pop %v673
  %v675 = vmul.f32 %v663, 1.442695
  %v676 = vpow.pop %v675
  %v677 = vmul.f32 %v664, 1.442695
  %v678 = vpow.pop %v677
  %v679 = vmul.f32 %v665, 1.442695
  %v680 = vpow.pop %v679
  %v681 = vmul.f32 %v666, 1.442695
  %v682 = vpow.pop %v681
  %v683 = vsel %vm643, %v668, 0.0
  %v684 = vsel %vm643, %v670, 0.0
  %v685 = vadd.f32 %v683, %v684
  %v686 = vsel %vm643, %v672, 0.0
  %v687 = vadd.f32 %v685, %v686
  %v688 = vsel %vm643, %v674, 0.0
  %v689 = vadd.f32 %v687, %v688
  %v690 = vsel %vm643, %v676, 0.0
  %v691 = vadd.f32 %v689, %v690
  %v692 = vsel %vm643, %v678, 0.0
  %v693 = vadd.f32 %v691, %v692
  %v694 = vsel %vm643, %v680, 0.0
  %v695 = vadd.f32 %v693, %v694
  %v696 = vsel %vm643, %v682, 0.0
  %v697 = vadd.f32 %v695, %v696
  %v698 = vrcp.pop %v697
  %v699 = vmul.f32 %v668, %v698
  %v700 = vmul.f32 %v670, %v698
  %v701 = vmul.f32 %v672, %v698
  %v702 = vmul.f32 %v674, %v698
  %v703 = vmul.f32 %v676, %v698
  %v704 = vmul.f32 %v678, %v698
  %v705 = vmul.f32 %v680, %v698
  %v706 = vmul.f32 %v682, %v698
  %708 = vset.pattern.permute.xlu0 0
  %709 = vperm.xlu0 %708, %v699
  %v710 = vpop.permute.xlu0 %709
  %713 = vset.pattern.permute.xlu0 0
  %714 = vperm.xlu0 %713, %v700
  %v715 = vpop.permute.xlu0 %714
  %718 = vset.pattern.permute.xlu0 0
  %719 = vperm.xlu0 %718, %v701
  %v720 = vpop.permute.xlu0 %719
  %723 = vset.pattern.permute.xlu0 0
  %724 = vperm.xlu0 %723, %v702
  %v725 = vpop.permute.xlu0 %724
  %728 = vset.pattern.permute.xlu0 0
  %729 = vperm.xlu0 %728, %v703
  %v730 = vpop.permute.xlu0 %729
  %733 = vset.pattern.permute.xlu0 0
  %734 = vperm.xlu0 %733, %v704
  %v735 = vpop.permute.xlu0 %734
  %738 = vset.pattern.permute.xlu0 0
  %739 = vperm.xlu0 %738, %v705
  %v740 = vpop.permute.xlu0 %739
  %743 = vset.pattern.permute.xlu0 0
  %744 = vperm.xlu0 %743, %v706
  %v745 = vpop.permute.xlu0 %744
  %v747 = vmul.f32 %v710, %v138
  %v748 = vmul.f32 %v715, %v141
  %v749 = vmul.f32 %v720, %v146
  %v750 = vmul.f32 %v725, %v149
  %v751 = vmul.f32 %v730, %v154
  %v752 = vmul.f32 %v735, %v157
  %v753 = vmul.f32 %v740, %v162
  %v754 = vmul.f32 %v745, %v165
  %v755 = vsel %vm90, %v747, 0.0
  %v756 = vsel %vm90, %v748, 0.0
  %v757 = vadd.f32 %v755, %v756
  %v758 = vsel %vm90, %v749, 0.0
  %v759 = vadd.f32 %v757, %v758
  %v760 = vsel %vm90, %v750, 0.0
  %v761 = vadd.f32 %v759, %v760
  %v762 = vsel %vm90, %v751, 0.0
  %v763 = vadd.f32 %v761, %v762
  %v764 = vsel %vm90, %v752, 0.0
  %v765 = vadd.f32 %v763, %v764
  %v766 = vsel %vm90, %v753, 0.0
  %v767 = vadd.f32 %v765, %v766
  %v768 = vsel %vm90, %v754, 0.0
  %v769 = vadd.f32 %v767, %v768
  %v771 = vcombine.high %v472, %v472
  %v773 = vunpack.c.l.s4 1966171168
  %v774 = vunpack.c.0.s8 %v773
  %v775 = vlaneseq
  %v776 = vshrl.u32 %v775, 7
  %v777 = vsub.s32 %v774, %v776
  %v778 = vrot.slane %v472, %v777
  %v780 = vunpack.c.l.s4 1966171168
  %v781 = vunpack.c.0.s8 %v780
  %v782 = vlaneseq
  %v783 = vshrl.u32 %v782, 7
  %v784 = vsub.s32 %v781, %v783
  %v785 = vrot.slane %v771, %v784
  %v786 = vcombine.high %v778, %v778
  %v787 = vcombine.high %v785, %v785
  %v789 = vunpack.c.l.s4 1966171168
  %v790 = vunpack.c.0.s8 %v789
  %v791 = vlaneseq
  %v792 = vshrl.u32 %v791, 7
  %v793 = vsub.s32 %v790, %v792
  %v794 = vrot.slane %v778, %v793
  %v796 = vunpack.c.l.s4 1966171168
  %v797 = vunpack.c.0.s8 %v796
  %v798 = vlaneseq
  %v799 = vshrl.u32 %v798, 7
  %v800 = vsub.s32 %v797, %v799
  %v801 = vrot.slane %v785, %v800
  %v803 = vunpack.c.l.s4 1966171168
  %v804 = vunpack.c.0.s8 %v803
  %v805 = vlaneseq
  %v806 = vshrl.u32 %v805, 7
  %v807 = vsub.s32 %v804, %v806
  %v808 = vrot.slane %v786, %v807
  %v810 = vunpack.c.l.s4 1966171168
  %v811 = vunpack.c.0.s8 %v810
  %v812 = vlaneseq
  %v813 = vshrl.u32 %v812, 7
  %v814 = vsub.s32 %v811, %v813
  %v815 = vrot.slane %v787, %v814
  %v816 = vcombine.high %v794, %v794
  %v817 = vcombine.high %v801, %v801
  %v818 = vcombine.high %v808, %v808
  %v819 = vcombine.high %v815, %v815
  %v820 = vlaneseq
  %v821 = vshrl.u32 %v820, 7
  %v822 = vsub.s32 0, %v821
  %v823 = vrot.slane %v794, %v822
  %v824 = vlaneseq
  %v825 = vshrl.u32 %v824, 7
  %v826 = vsub.s32 0, %v825
  %v827 = vrot.slane %v808, %v826
  %v828 = vlaneseq
  %v829 = vshrl.u32 %v828, 7
  %v830 = vsub.s32 0, %v829
  %v831 = vrot.slane %v816, %v830
  %v832 = vlaneseq
  %v833 = vshrl.u32 %v832, 7
  %v834 = vsub.s32 0, %v833
  %v835 = vrot.slane %v818, %v834
  %v836 = vlaneseq
  %v837 = vshrl.u32 %v836, 7
  %v838 = vsub.s32 0, %v837
  %v839 = vrot.slane %v801, %v838
  %v840 = vlaneseq
  %v841 = vshrl.u32 %v840, 7
  %v842 = vsub.s32 0, %v841
  %v843 = vrot.slane %v815, %v842
  %v844 = vlaneseq
  %v845 = vshrl.u32 %v844, 7
  %v846 = vsub.s32 0, %v845
  %v847 = vrot.slane %v817, %v846
  %v848 = vlaneseq
  %v849 = vshrl.u32 %v848, 7
  %v850 = vsub.s32 0, %v849
  %v851 = vrot.slane %v819, %v850
  %v860 = vadd.f32 %v823, %v299
  %v861 = vadd.f32 %v823, %v302
  %v862 = vadd.f32 %v827, %v307
  %v863 = vadd.f32 %v827, %v310
  %v864 = vadd.f32 %v831, %v315
  %v865 = vadd.f32 %v831, %v318
  %v866 = vadd.f32 %v835, %v323
  %v867 = vadd.f32 %v835, %v326
  %v868 = vadd.f32 %v839, %v331
  %v869 = vadd.f32 %v839, %v334
  %v870 = vadd.f32 %v843, %v339
  %v871 = vadd.f32 %v843, %v342
  %v872 = vadd.f32 %v847, %v347
  %v873 = vadd.f32 %v847, %v350
  %v874 = vadd.f32 %v851, %v355
  %v875 = vadd.f32 %v851, %v358
  %v876 = vtanh.pop %v860
  %v877 = vtanh.pop %v861
  %v878 = vtanh.pop %v862
  %v879 = vtanh.pop %v863
  %v880 = vtanh.pop %v864
  %v881 = vtanh.pop %v865
  %v882 = vtanh.pop %v866
  %v883 = vtanh.pop %v867
  %v884 = vtanh.pop %v868
  %v885 = vtanh.pop %v869
  %v886 = vtanh.pop %v870
  %v887 = vtanh.pop %v871
  %v888 = vtanh.pop %v872
  %v889 = vtanh.pop %v873
  %v890 = vtanh.pop %v874
  %v891 = vtanh.pop %v875
  %v892 = vld [vmem:[%s9] sm:$0xff]
  %v893 = vld [vmem:[%s9 + $0x8] sm:$0xff]
  %v894 = vld [vmem:[%s9 + $0x10] sm:$0xff]
  %v895 = vld [vmem:[%s9 + $0x18] sm:$0xff]
  %v897 = vsel %vm90, %v876, 0
  %v900 = vsel %vm90, %v877, 0
  %v903 = vsel %vm90, %v878, 0
  %v906 = vsel %vm90, %v879, 0
  %v909 = vsel %vm90, %v880, 0
  %v912 = vsel %vm90, %v881, 0
  %v915 = vsel %vm90, %v882, 0
  %v918 = vsel %vm90, %v883, 0
  %v921 = vsel %vm90, %v884, 0
  %v924 = vsel %vm90, %v885, 0
  %v927 = vsel %vm90, %v886, 0
  %v930 = vsel %vm90, %v887, 0
  %v933 = vsel %vm90, %v888, 0
  %v936 = vsel %vm90, %v889, 0
  %v939 = vsel %vm90, %v890, 0
  %v942 = vsel %vm90, %v891, 0
  %944 = vmatprep.subr.mxu0 0.0
  %945 = vmatpush1.msra.mxu0 0.0
  %946 = vmatprep.subr.mxu0 0.0
  %947 = vmatpush1.msra.mxu0 0.0
  %948 = vmatprep.subr.mxu0 0.0
  %949 = vmatpush1.msra.mxu0 0.0
  %950 = vmatprep.subr.mxu0 0.0
  %951 = vmatpush1.msra.mxu0 0.0
  %952 = vmatprep.subr.mxu0 0.0
  %953 = vmatpush1.msra.mxu0 0.0
  %954 = vmatprep.subr.mxu0 0.0
  %955 = vmatpush1.msra.mxu0 0.0
  %956 = vmatprep.subr.mxu0 0.0
  %957 = vmatpush1.msra.mxu0 0.0
  %958 = vmatprep.subr.mxu0 0.0
  %959 = vmatpush1.msra.mxu0 0.0
  %960 = vmatprep.subr.mxu0 0.0
  %961 = vmatpush1.msra.mxu0 0.0
  %962 = vmatprep.subr.mxu0 0.0
  %963 = vmatpush1.msra.mxu0 0.0
  %964 = vmatprep.subr.mxu0 0.0
  %965 = vmatpush1.msra.mxu0 0.0
  %966 = vmatprep.subr.mxu0 0.0
  %967 = vmatpush1.msra.mxu0 0.0
  %968 = vmatprep.subr.mxu0 0.0
  %969 = vmatpush1.msra.mxu0 %v895
  %970 = vmatprep.subr.mxu0 0.0
  %971 = vmatpush1.msra.mxu0 %v894
  %972 = vmatprep.subr.mxu0 0.0
  %973 = vmatpush1.msra.mxu0 %v893
  %974 = vmatprep.subr.mxu0 0.0
  %975 = vmatpush1.msra.mxu0 %v892
  %976 = vmatprep.subr.mxu0 0.0
  %977 = vmatpush2.msra.mxu0 0.0
  %978 = vmatprep.subr.mxu0 0.0
  %979 = vmatpush2.msra.mxu0 0.0
  %980 = vmatprep.subr.mxu0 0.0
  %981 = vmatpush2.msra.mxu0 0.0
  %982 = vmatprep.subr.mxu0 0.0
  %983 = vmatpush2.msra.mxu0 0.0
  %984 = vmatprep.subr.mxu0 0.0
  %985 = vmatpush2.msra.mxu0 0.0
  %986 = vmatprep.subr.mxu0 0.0
  %987 = vmatpush2.msra.mxu0 0.0
  %988 = vmatprep.subr.mxu0 0.0
  %989 = vmatpush2.msra.mxu0 0.0
  %990 = vmatprep.subr.mxu0 0.0
  %991 = vmatpush2.msra.mxu0 0.0
  %992 = vmatprep.subr.mxu0 0.0
  %993 = vmatpush2.msra.mxu0 0.0
  %994 = vmatprep.subr.mxu0 0.0
  %995 = vmatpush2.msra.mxu0 0.0
  %996 = vmatprep.subr.mxu0 0.0
  %997 = vmatpush2.msra.mxu0 0.0
  %998 = vmatprep.subr.mxu0 0.0
  %999 = vmatpush2.msra.mxu0 0.0
  %1000 = vmatprep.subr.mxu0 0.0
  %1001 = vmatpush2.msra.mxu0 0.0
  %1002 = vmatprep.subr.mxu0 0.0
  %1003 = vmatpush2.msra.mxu0 0.0
  %1004 = vmatprep.subr.mxu0 0.0
  %1005 = vmatpush2.msra.mxu0 0.0
  %1006 = vmatprep.subr.mxu0 0.0
  %1007 = vmatpush2.msra.mxu0 0.0
  %1008 = vmatprep.mubr.f32.mxu0 0.0
  %1009 = vmatmul.mubr.f32.gmra.mxu0 %v897
  %v1010 = vpop.f32.mrf.mxu0
  %v1011 = vadd.f32 0.0, %v1010
  %v1012 = vpop.f32.mrf.mxu0
  %1013 = vmatprep.mubr.f32.mxu0 0.0
  %1014 = vmatmul.mubr.f32.gmra.mxu0 %v900
  %v1015 = vpop.f32.mrf.mxu0
  %v1016 = vadd.f32 0.0, %v1015
  %v1017 = vpop.f32.mrf.mxu0
  %1018 = vmatprep.mubr.f32.mxu0 0.0
  %1019 = vmatmul.mubr.f32.gmra.mxu0 %v903
  %v1020 = vpop.f32.mrf.mxu0
  %v1021 = vadd.f32 0.0, %v1020
  %v1022 = vpop.f32.mrf.mxu0
  %1023 = vmatprep.mubr.f32.mxu0 0.0
  %1024 = vmatmul.mubr.f32.gmra.mxu0 %v906
  %v1025 = vpop.f32.mrf.mxu0
  %v1026 = vadd.f32 0.0, %v1025
  %v1027 = vpop.f32.mrf.mxu0
  %1028 = vmatprep.mubr.f32.mxu0 0.0
  %1029 = vmatmul.mubr.f32.gmra.mxu0 %v909
  %v1030 = vpop.f32.mrf.mxu0
  %v1031 = vadd.f32 0.0, %v1030
  %v1032 = vpop.f32.mrf.mxu0
  %1033 = vmatprep.mubr.f32.mxu0 0.0
  %1034 = vmatmul.mubr.f32.gmra.mxu0 %v912
  %v1035 = vpop.f32.mrf.mxu0
  %v1036 = vadd.f32 0.0, %v1035
  %v1037 = vpop.f32.mrf.mxu0
  %1038 = vmatprep.mubr.f32.mxu0 0.0
  %1039 = vmatmul.mubr.f32.gmra.mxu0 %v915
  %v1040 = vpop.f32.mrf.mxu0
  %v1041 = vadd.f32 0.0, %v1040
  %v1042 = vpop.f32.mrf.mxu0
  %1043 = vmatprep.mubr.f32.mxu0 0.0
  %1044 = vmatmul.mubr.f32.gmra.mxu0 %v918
  %v1045 = vpop.f32.mrf.mxu0
  %v1046 = vadd.f32 0.0, %v1045
  %v1047 = vpop.f32.mrf.mxu0
  %1048 = vmatprep.mubr.f32.mxu0 0.0
  %1049 = vmatmul.mubr.f32.gmra.mxu0 %v921
  %v1050 = vpop.f32.mrf.mxu0
  %v1051 = vadd.f32 0.0, %v1050
  %v1052 = vpop.f32.mrf.mxu0
  %1053 = vmatprep.mubr.f32.mxu0 0.0
  %1054 = vmatmul.mubr.f32.gmra.mxu0 %v924
  %v1055 = vpop.f32.mrf.mxu0
  %v1056 = vadd.f32 0.0, %v1055
  %v1057 = vpop.f32.mrf.mxu0
  %1058 = vmatprep.mubr.f32.mxu0 0.0
  %1059 = vmatmul.mubr.f32.gmra.mxu0 %v927
  %v1060 = vpop.f32.mrf.mxu0
  %v1061 = vadd.f32 0.0, %v1060
  %v1062 = vpop.f32.mrf.mxu0
  %1063 = vmatprep.mubr.f32.mxu0 0.0
  %1064 = vmatmul.mubr.f32.gmra.mxu0 %v930
  %v1065 = vpop.f32.mrf.mxu0
  %v1066 = vadd.f32 0.0, %v1065
  %v1067 = vpop.f32.mrf.mxu0
  %1068 = vmatprep.mubr.f32.mxu0 0.0
  %1069 = vmatmul.mubr.f32.gmra.mxu0 %v933
  %v1070 = vpop.f32.mrf.mxu0
  %v1071 = vadd.f32 0.0, %v1070
  %v1072 = vpop.f32.mrf.mxu0
  %1073 = vmatprep.mubr.f32.mxu0 0.0
  %1074 = vmatmul.mubr.f32.gmra.mxu0 %v936
  %v1075 = vpop.f32.mrf.mxu0
  %v1076 = vadd.f32 0.0, %v1075
  %v1077 = vpop.f32.mrf.mxu0
  %1078 = vmatprep.mubr.f32.mxu0 0.0
  %1079 = vmatmul.mubr.f32.gmra.mxu0 %v939
  %v1080 = vpop.f32.mrf.mxu0
  %v1081 = vadd.f32 0.0, %v1080
  %v1082 = vpop.f32.mrf.mxu0
  %1083 = vmatprep.mubr.f32.mxu0 0.0
  %1084 = vmatmul.mubr.f32.gmra.mxu0 %v942
  %v1085 = vpop.f32.mrf.mxu0
  %v1086 = vadd.f32 0.0, %v1085
  %v1087 = vpop.f32.mrf.mxu0
  %1088 = vdwg.mxu0
  %v1089 = vsel %vm643, %v1011, -inf
  %v1090 = vsel %vm643, %v1016, -inf
  %v1091 = vmax.f32 %v1089, %v1090
  %v1092 = vrot.slane %v1091, 4
  %v1093 = vmax.f32 %v1091, %v1092
  %v1094 = vrot.slane %v1093, 2
  %v1095 = vmax.f32 %v1093, %v1094
  %v1096 = vrot.slane %v1095, 1
  %v1097 = vmax.f32 %v1095, %v1096
  %v1098 = vsel %vm643, %v1021, -inf
  %v1099 = vsel %vm643, %v1026, -inf
  %v1100 = vmax.f32 %v1098, %v1099
  %v1101 = vrot.slane %v1100, 4
  %v1102 = vmax.f32 %v1100, %v1101
  %v1103 = vrot.slane %v1102, 2
  %v1104 = vmax.f32 %v1102, %v1103
  %v1105 = vrot.slane %v1104, 1
  %v1106 = vmax.f32 %v1104, %v1105
  %v1107 = vsel %vm643, %v1031, -inf
  %v1108 = vsel %vm643, %v1036, -inf
  %v1109 = vmax.f32 %v1107, %v1108
  %v1110 = vrot.slane %v1109, 4
  %v1111 = vmax.f32 %v1109, %v1110
  %v1112 = vrot.slane %v1111, 2
  %v1113 = vmax.f32 %v1111, %v1112
  %v1114 = vrot.slane %v1113, 1
  %v1115 = vmax.f32 %v1113, %v1114
  %v1116 = vsel %vm643, %v1041, -inf
  %v1117 = vsel %vm643, %v1046, -inf
  %v1118 = vmax.f32 %v1116, %v1117
  %v1119 = vrot.slane %v1118, 4
  %v1120 = vmax.f32 %v1118, %v1119
  %v1121 = vrot.slane %v1120, 2
  %v1122 = vmax.f32 %v1120, %v1121
  %v1123 = vrot.slane %v1122, 1
  %v1124 = vmax.f32 %v1122, %v1123
  %v1125 = vsel %vm643, %v1051, -inf
  %v1126 = vsel %vm643, %v1056, -inf
  %v1127 = vmax.f32 %v1125, %v1126
  %v1128 = vrot.slane %v1127, 4
  %v1129 = vmax.f32 %v1127, %v1128
  %v1130 = vrot.slane %v1129, 2
  %v1131 = vmax.f32 %v1129, %v1130
  %v1132 = vrot.slane %v1131, 1
  %v1133 = vmax.f32 %v1131, %v1132
  %v1134 = vsel %vm643, %v1061, -inf
  %v1135 = vsel %vm643, %v1066, -inf
  %v1136 = vmax.f32 %v1134, %v1135
  %v1137 = vrot.slane %v1136, 4
  %v1138 = vmax.f32 %v1136, %v1137
  %v1139 = vrot.slane %v1138, 2
  %v1140 = vmax.f32 %v1138, %v1139
  %v1141 = vrot.slane %v1140, 1
  %v1142 = vmax.f32 %v1140, %v1141
  %v1143 = vsel %vm643, %v1071, -inf
  %v1144 = vsel %vm643, %v1076, -inf
  %v1145 = vmax.f32 %v1143, %v1144
  %v1146 = vrot.slane %v1145, 4
  %v1147 = vmax.f32 %v1145, %v1146
  %v1148 = vrot.slane %v1147, 2
  %v1149 = vmax.f32 %v1147, %v1148
  %v1150 = vrot.slane %v1149, 1
  %v1151 = vmax.f32 %v1149, %v1150
  %v1152 = vsel %vm643, %v1081, -inf
  %v1153 = vsel %vm643, %v1086, -inf
  %v1154 = vmax.f32 %v1152, %v1153
  %v1155 = vrot.slane %v1154, 4
  %v1156 = vmax.f32 %v1154, %v1155
  %v1157 = vrot.slane %v1156, 2
  %v1158 = vmax.f32 %v1156, %v1157
  %v1159 = vrot.slane %v1158, 1
  %v1160 = vmax.f32 %v1158, %v1159
  %v1161 = vsub.f32 %v1011, %v1097
  %v1162 = vsub.f32 %v1016, %v1097
  %v1163 = vsub.f32 %v1021, %v1106
  %v1164 = vsub.f32 %v1026, %v1106
  %v1165 = vsub.f32 %v1031, %v1115
  %v1166 = vsub.f32 %v1036, %v1115
  %v1167 = vsub.f32 %v1041, %v1124
  %v1168 = vsub.f32 %v1046, %v1124
  %v1169 = vsub.f32 %v1051, %v1133
  %v1170 = vsub.f32 %v1056, %v1133
  %v1171 = vsub.f32 %v1061, %v1142
  %v1172 = vsub.f32 %v1066, %v1142
  %v1173 = vsub.f32 %v1071, %v1151
  %v1174 = vsub.f32 %v1076, %v1151
  %v1175 = vsub.f32 %v1081, %v1160
  %v1176 = vsub.f32 %v1086, %v1160
  %v1177 = vmul.f32 %v1161, 1.442695
  %v1178 = vpow.pop %v1177
  %v1179 = vmul.f32 %v1162, 1.442695
  %v1180 = vpow.pop %v1179
  %v1181 = vmul.f32 %v1163, 1.442695
  %v1182 = vpow.pop %v1181
  %v1183 = vmul.f32 %v1164, 1.442695
  %v1184 = vpow.pop %v1183
  %v1185 = vmul.f32 %v1165, 1.442695
  %v1186 = vpow.pop %v1185
  %v1187 = vmul.f32 %v1166, 1.442695
  %v1188 = vpow.pop %v1187
  %v1189 = vmul.f32 %v1167, 1.442695
  %v1190 = vpow.pop %v1189
  %v1191 = vmul.f32 %v1168, 1.442695
  %v1192 = vpow.pop %v1191
  %v1193 = vmul.f32 %v1169, 1.442695
  %v1194 = vpow.pop %v1193
  %v1195 = vmul.f32 %v1170, 1.442695
  %v1196 = vpow.pop %v1195
  %v1197 = vmul.f32 %v1171, 1.442695
  %v1198 = vpow.pop %v1197
  %v1199 = vmul.f32 %v1172, 1.442695
  %v1200 = vpow.pop %v1199
  %v1201 = vmul.f32 %v1173, 1.442695
  %v1202 = vpow.pop %v1201
  %v1203 = vmul.f32 %v1174, 1.442695
  %v1204 = vpow.pop %v1203
  %v1205 = vmul.f32 %v1175, 1.442695
  %v1206 = vpow.pop %v1205
  %v1207 = vmul.f32 %v1176, 1.442695
  %v1208 = vpow.pop %v1207
  %v1209 = vsel %vm643, %v1178, 0.0
  %v1210 = vsel %vm643, %v1180, 0.0
  %v1211 = vadd.f32 %v1209, %v1210
  %v1212 = vrot.slane %v1211, 4
  %v1213 = vadd.f32 %v1211, %v1212
  %v1214 = vrot.slane %v1213, 2
  %v1215 = vadd.f32 %v1213, %v1214
  %v1216 = vrot.slane %v1215, 1
  %v1217 = vadd.f32 %v1215, %v1216
  %v1218 = vsel %vm643, %v1182, 0.0
  %v1219 = vsel %vm643, %v1184, 0.0
  %v1220 = vadd.f32 %v1218, %v1219
  %v1221 = vrot.slane %v1220, 4
  %v1222 = vadd.f32 %v1220, %v1221
  %v1223 = vrot.slane %v1222, 2
  %v1224 = vadd.f32 %v1222, %v1223
  %v1225 = vrot.slane %v1224, 1
  %v1226 = vadd.f32 %v1224, %v1225
  %v1227 = vsel %vm643, %v1186, 0.0
  %v1228 = vsel %vm643, %v1188, 0.0
  %v1229 = vadd.f32 %v1227, %v1228
  %v1230 = vrot.slane %v1229, 4
  %v1231 = vadd.f32 %v1229, %v1230
  %v1232 = vrot.slane %v1231, 2
  %v1233 = vadd.f32 %v1231, %v1232
  %v1234 = vrot.slane %v1233, 1
  %v1235 = vadd.f32 %v1233, %v1234
  %v1236 = vsel %vm643, %v1190, 0.0
  %v1237 = vsel %vm643, %v1192, 0.0
  %v1238 = vadd.f32 %v1236, %v1237
  %v1239 = vrot.slane %v1238, 4
  %v1240 = vadd.f32 %v1238, %v1239
  %v1241 = vrot.slane %v1240, 2
  %v1242 = vadd.f32 %v1240, %v1241
  %v1243 = vrot.slane %v1242, 1
  %v1244 = vadd.f32 %v1242, %v1243
  %v1245 = vsel %vm643, %v1194, 0.0
  %v1246 = vsel %vm643, %v1196, 0.0
  %v1247 = vadd.f32 %v1245, %v1246
  %v1248 = vrot.slane %v1247, 4
  %v1249 = vadd.f32 %v1247, %v1248
  %v1250 = vrot.slane %v1249, 2
  %v1251 = vadd.f32 %v1249, %v1250
  %v1252 = vrot.slane %v1251, 1
  %v1253 = vadd.f32 %v1251, %v1252
  %v1254 = vsel %vm643, %v1198, 0.0
  %v1255 = vsel %vm643, %v1200, 0.0
  %v1256 = vadd.f32 %v1254, %v1255
  %v1257 = vrot.slane %v1256, 4
  %v1258 = vadd.f32 %v1256, %v1257
  %v1259 = vrot.slane %v1258, 2
  %v1260 = vadd.f32 %v1258, %v1259
  %v1261 = vrot.slane %v1260, 1
  %v1262 = vadd.f32 %v1260, %v1261
  %v1263 = vsel %vm643, %v1202, 0.0
  %v1264 = vsel %vm643, %v1204, 0.0
  %v1265 = vadd.f32 %v1263, %v1264
  %v1266 = vrot.slane %v1265, 4
  %v1267 = vadd.f32 %v1265, %v1266
  %v1268 = vrot.slane %v1267, 2
  %v1269 = vadd.f32 %v1267, %v1268
  %v1270 = vrot.slane %v1269, 1
  %v1271 = vadd.f32 %v1269, %v1270
  %v1272 = vsel %vm643, %v1206, 0.0
  %v1273 = vsel %vm643, %v1208, 0.0
  %v1274 = vadd.f32 %v1272, %v1273
  %v1275 = vrot.slane %v1274, 4
  %v1276 = vadd.f32 %v1274, %v1275
  %v1277 = vrot.slane %v1276, 2
  %v1278 = vadd.f32 %v1276, %v1277
  %v1279 = vrot.slane %v1278, 1
  %v1280 = vadd.f32 %v1278, %v1279
  %v1281 = vrcp.pop %v1217
  %v1282 = vrcp.pop %v1226
  %v1283 = vrcp.pop %v1235
  %v1284 = vrcp.pop %v1244
  %v1285 = vrcp.pop %v1253
  %v1286 = vrcp.pop %v1262
  %v1287 = vrcp.pop %v1271
  %v1288 = vrcp.pop %v1280
  %v1289 = vmul.f32 %v1178, %v1281
  %v1290 = vmul.f32 %v1180, %v1281
  %v1291 = vmul.f32 %v1182, %v1282
  %v1292 = vmul.f32 %v1184, %v1282
  %v1293 = vmul.f32 %v1186, %v1283
  %v1294 = vmul.f32 %v1188, %v1283
  %v1295 = vmul.f32 %v1190, %v1284
  %v1296 = vmul.f32 %v1192, %v1284
  %v1297 = vmul.f32 %v1194, %v1285
  %v1298 = vmul.f32 %v1196, %v1285
  %v1299 = vmul.f32 %v1198, %v1286
  %v1300 = vmul.f32 %v1200, %v1286
  %v1301 = vmul.f32 %v1202, %v1287
  %v1302 = vmul.f32 %v1204, %v1287
  %v1303 = vmul.f32 %v1206, %v1288
  %v1304 = vmul.f32 %v1208, %v1288
  %1306 = vset.pattern.permute.xlu0 0
  %1307 = vperm.xlu0 %1306, %v1289
  %v1308 = vpop.permute.xlu0 %1307
  %1311 = vset.pattern.permute.xlu0 0
  %1312 = vperm.xlu0 %1311, %v1290
  %v1313 = vpop.permute.xlu0 %1312
  %1316 = vset.pattern.permute.xlu0 0
  %1317 = vperm.xlu0 %1316, %v1291
  %v1318 = vpop.permute.xlu0 %1317
  %1321 = vset.pattern.permute.xlu0 0
  %1322 = vperm.xlu0 %1321, %v1292
  %v1323 = vpop.permute.xlu0 %1322
  %1326 = vset.pattern.permute.xlu0 0
  %1327 = vperm.xlu0 %1326, %v1293
  %v1328 = vpop.permute.xlu0 %1327
  %1331 = vset.pattern.permute.xlu0 0
  %1332 = vperm.xlu0 %1331, %v1294
  %v1333 = vpop.permute.xlu0 %1332
  %1336 = vset.pattern.permute.xlu0 0
  %1337 = vperm.xlu0 %1336, %v1295
  %v1338 = vpop.permute.xlu0 %1337
  %1341 = vset.pattern.permute.xlu0 0
  %1342 = vperm.xlu0 %1341, %v1296
  %v1343 = vpop.permute.xlu0 %1342
  %1346 = vset.pattern.permute.xlu0 0
  %1347 = vperm.xlu0 %1346, %v1297
  %v1348 = vpop.permute.xlu0 %1347
  %1351 = vset.pattern.permute.xlu0 0
  %1352 = vperm.xlu0 %1351, %v1298
  %v1353 = vpop.permute.xlu0 %1352
  %1356 = vset.pattern.permute.xlu0 0
  %1357 = vperm.xlu0 %1356, %v1299
  %v1358 = vpop.permute.xlu0 %1357
  %1361 = vset.pattern.permute.xlu0 0
  %1362 = vperm.xlu0 %1361, %v1300
  %v1363 = vpop.permute.xlu0 %1362
  %1366 = vset.pattern.permute.xlu0 0
  %1367 = vperm.xlu0 %1366, %v1301
  %v1368 = vpop.permute.xlu0 %1367
  %1371 = vset.pattern.permute.xlu0 0
  %1372 = vperm.xlu0 %1371, %v1302
  %v1373 = vpop.permute.xlu0 %1372
  %1376 = vset.pattern.permute.xlu0 0
  %1377 = vperm.xlu0 %1376, %v1303
  %v1378 = vpop.permute.xlu0 %1377
  %1381 = vset.pattern.permute.xlu0 0
  %1382 = vperm.xlu0 %1381, %v1304
  %v1383 = vpop.permute.xlu0 %1382
  %v1385 = vmul.f32 %v1308, %v299
  %v1386 = vmul.f32 %v1313, %v302
  %v1387 = vmul.f32 %v1318, %v307
  %v1388 = vmul.f32 %v1323, %v310
  %v1389 = vmul.f32 %v1328, %v315
  %v1390 = vmul.f32 %v1333, %v318
  %v1391 = vmul.f32 %v1338, %v323
  %v1392 = vmul.f32 %v1343, %v326
  %v1393 = vmul.f32 %v1348, %v331
  %v1394 = vmul.f32 %v1353, %v334
  %v1395 = vmul.f32 %v1358, %v339
  %v1396 = vmul.f32 %v1363, %v342
  %v1397 = vmul.f32 %v1368, %v347
  %v1398 = vmul.f32 %v1373, %v350
  %v1399 = vmul.f32 %v1378, %v355
  %v1400 = vmul.f32 %v1383, %v358
  %v1401 = vsel %vm90, %v1385, 0.0
  %v1402 = vsel %vm90, %v1386, 0.0
  %v1403 = vadd.f32 %v1401, %v1402
  %v1404 = vrot.slane %v1403, 4
  %v1405 = vadd.f32 %v1403, %v1404
  %v1406 = vrot.slane %v1405, 2
  %v1407 = vadd.f32 %v1405, %v1406
  %v1408 = vrot.slane %v1407, 1
  %v1409 = vadd.f32 %v1407, %v1408
  %v1410 = vsel %vm90, %v1387, 0.0
  %v1411 = vsel %vm90, %v1388, 0.0
  %v1412 = vadd.f32 %v1410, %v1411
  %v1413 = vrot.slane %v1412, 4
  %v1414 = vadd.f32 %v1412, %v1413
  %v1415 = vrot.slane %v1414, 2
  %v1416 = vadd.f32 %v1414, %v1415
  %v1417 = vrot.slane %v1416, 1
  %v1418 = vadd.f32 %v1416, %v1417
  %v1419 = vsel %vm90, %v1389, 0.0
  %v1420 = vsel %vm90, %v1390, 0.0
  %v1421 = vadd.f32 %v1419, %v1420
  %v1422 = vrot.slane %v1421, 4
  %v1423 = vadd.f32 %v1421, %v1422
  %v1424 = vrot.slane %v1423, 2
  %v1425 = vadd.f32 %v1423, %v1424
  %v1426 = vrot.slane %v1425, 1
  %v1427 = vadd.f32 %v1425, %v1426
  %v1428 = vsel %vm90, %v1391, 0.0
  %v1429 = vsel %vm90, %v1392, 0.0
  %v1430 = vadd.f32 %v1428, %v1429
  %v1431 = vrot.slane %v1430, 4
  %v1432 = vadd.f32 %v1430, %v1431
  %v1433 = vrot.slane %v1432, 2
  %v1434 = vadd.f32 %v1432, %v1433
  %v1435 = vrot.slane %v1434, 1
  %v1436 = vadd.f32 %v1434, %v1435
  %v1437 = vsel %vm90, %v1393, 0.0
  %v1438 = vsel %vm90, %v1394, 0.0
  %v1439 = vadd.f32 %v1437, %v1438
  %v1440 = vrot.slane %v1439, 4
  %v1441 = vadd.f32 %v1439, %v1440
  %v1442 = vrot.slane %v1441, 2
  %v1443 = vadd.f32 %v1441, %v1442
  %v1444 = vrot.slane %v1443, 1
  %v1445 = vadd.f32 %v1443, %v1444
  %v1446 = vsel %vm90, %v1395, 0.0
  %v1447 = vsel %vm90, %v1396, 0.0
  %v1448 = vadd.f32 %v1446, %v1447
  %v1449 = vrot.slane %v1448, 4
  %v1450 = vadd.f32 %v1448, %v1449
  %v1451 = vrot.slane %v1450, 2
  %v1452 = vadd.f32 %v1450, %v1451
  %v1453 = vrot.slane %v1452, 1
  %v1454 = vadd.f32 %v1452, %v1453
  %v1455 = vsel %vm90, %v1397, 0.0
  %v1456 = vsel %vm90, %v1398, 0.0
  %v1457 = vadd.f32 %v1455, %v1456
  %v1458 = vrot.slane %v1457, 4
  %v1459 = vadd.f32 %v1457, %v1458
  %v1460 = vrot.slane %v1459, 2
  %v1461 = vadd.f32 %v1459, %v1460
  %v1462 = vrot.slane %v1461, 1
  %v1463 = vadd.f32 %v1461, %v1462
  %v1464 = vsel %vm90, %v1399, 0.0
  %v1465 = vsel %vm90, %v1400, 0.0
  %v1466 = vadd.f32 %v1464, %v1465
  %v1467 = vrot.slane %v1466, 4
  %v1468 = vadd.f32 %v1466, %v1467
  %v1469 = vrot.slane %v1468, 2
  %v1470 = vadd.f32 %v1468, %v1469
  %v1471 = vrot.slane %v1470, 1
  %v1472 = vadd.f32 %v1470, %v1471
  %v1473 = vld [vmem:[%s10] sm:$0xff]
  %v1474 = vld [vmem:[%s10 + $0x8] sm:$0xff]
  %v1475 = vld [vmem:[%s10 + $0x10] sm:$0xff]
  %v1476 = vld [vmem:[%s10 + $0x18] sm:$0xff]
  %v1477 = vld [vmem:[%s11] sm:$0xff]
  %v1478 = vld [vmem:[%s11 + $0x8] sm:$0xff]
  %v1479 = vld [vmem:[%s11 + $0x10] sm:$0xff]
  %v1480 = vld [vmem:[%s11 + $0x18] sm:$0xff]
  %vm1489 = vcmask 1041409
  %v1490 = vsel %vm1489, %v1418, %v1409
  %vm1491 = vcmask 1042434
  %v1492 = vsel %vm1491, %v1427, %v1490
  %vm1493 = vcmask 1043459
  %v1494 = vsel %vm1493, %v1436, %v1492
  %vm1495 = vcmask 1044484
  %v1496 = vsel %vm1495, %v1445, %v1494
  %vm1497 = vcmask 1045509
  %v1498 = vsel %vm1497, %v1454, %v1496
  %vm1499 = vcmask 1046534
  %v1500 = vsel %vm1499, %v1463, %v1498
  %vm1501 = vcmask 1047559
  %v1502 = vsel %vm1501, %v1472, %v1500
  %v1503 = vsel %vm90, %v1502, 0
  %1505 = vmatprep.subr.mxu0 0.0
  %1506 = vmatpush1.msra.mxu0 0.0
  %1507 = vmatprep.subr.mxu0 0.0
  %1508 = vmatpush1.msra.mxu0 0.0
  %1509 = vmatprep.subr.mxu0 0.0
  %1510 = vmatpush1.msra.mxu0 0.0
  %1511 = vmatprep.subr.mxu0 0.0
  %1512 = vmatpush1.msra.mxu0 0.0
  %1513 = vmatprep.subr.mxu0 0.0
  %1514 = vmatpush1.msra.mxu0 0.0
  %1515 = vmatprep.subr.mxu0 0.0
  %1516 = vmatpush1.msra.mxu0 0.0
  %1517 = vmatprep.subr.mxu0 0.0
  %1518 = vmatpush1.msra.mxu0 0.0
  %1519 = vmatprep.subr.mxu0 0.0
  %1520 = vmatpush1.msra.mxu0 0.0
  %1521 = vmatprep.subr.mxu0 0.0
  %1522 = vmatpush1.msra.mxu0 0.0
  %1523 = vmatprep.subr.mxu0 0.0
  %1524 = vmatpush1.msra.mxu0 0.0
  %1525 = vmatprep.subr.mxu0 0.0
  %1526 = vmatpush1.msra.mxu0 0.0
  %1527 = vmatprep.subr.mxu0 0.0
  %1528 = vmatpush1.msra.mxu0 0.0
  %1529 = vmatprep.subr.mxu0 0.0
  %1530 = vmatpush1.msra.mxu0 %v1480
  %1531 = vmatprep.subr.mxu0 0.0
  %1532 = vmatpush1.msra.mxu0 %v1479
  %1533 = vmatprep.subr.mxu0 0.0
  %1534 = vmatpush1.msra.mxu0 %v1478
  %1535 = vmatprep.subr.mxu0 0.0
  %1536 = vmatpush1.msra.mxu0 %v1477
  %1537 = vmatprep.subr.mxu0 0.0
  %1538 = vmatpush2.msra.mxu0 0.0
  %1539 = vmatprep.subr.mxu0 0.0
  %1540 = vmatpush2.msra.mxu0 0.0
  %1541 = vmatprep.subr.mxu0 0.0
  %1542 = vmatpush2.msra.mxu0 0.0
  %1543 = vmatprep.subr.mxu0 0.0
  %1544 = vmatpush2.msra.mxu0 0.0
  %1545 = vmatprep.subr.mxu0 0.0
  %1546 = vmatpush2.msra.mxu0 0.0
  %1547 = vmatprep.subr.mxu0 0.0
  %1548 = vmatpush2.msra.mxu0 0.0
  %1549 = vmatprep.subr.mxu0 0.0
  %1550 = vmatpush2.msra.mxu0 0.0
  %1551 = vmatprep.subr.mxu0 0.0
  %1552 = vmatpush2.msra.mxu0 0.0
  %1553 = vmatprep.subr.mxu0 0.0
  %1554 = vmatpush2.msra.mxu0 0.0
  %1555 = vmatprep.subr.mxu0 0.0
  %1556 = vmatpush2.msra.mxu0 0.0
  %1557 = vmatprep.subr.mxu0 0.0
  %1558 = vmatpush2.msra.mxu0 0.0
  %1559 = vmatprep.subr.mxu0 0.0
  %1560 = vmatpush2.msra.mxu0 0.0
  %1561 = vmatprep.subr.mxu0 0.0
  %1562 = vmatpush2.msra.mxu0 0.0
  %1563 = vmatprep.subr.mxu0 0.0
  %1564 = vmatpush2.msra.mxu0 0.0
  %1565 = vmatprep.subr.mxu0 0.0
  %1566 = vmatpush2.msra.mxu0 0.0
  %1567 = vmatprep.subr.mxu0 0.0
  %1568 = vmatpush2.msra.mxu0 0.0
  %1569 = vmatprep.mubr.f32.mxu0 0.0
  %1570 = vmatmul.mubr.f32.gmra.mxu0 %v1503
  %v1571 = vpop.f32.mrf.mxu0
  %v1572 = vadd.f32 0.0, %v1571
  %v1573 = vpop.f32.mrf.mxu0
  %1574 = vdwg.mxu0
  %v1576 = vsel %vm90, %v769, 0
  %1578 = vmatprep.subr.mxu0 0.0
  %1579 = vmatpush1.msra.mxu0 0.0
  %1580 = vmatprep.subr.mxu0 0.0
  %1581 = vmatpush1.msra.mxu0 0.0
  %1582 = vmatprep.subr.mxu0 0.0
  %1583 = vmatpush1.msra.mxu0 0.0
  %1584 = vmatprep.subr.mxu0 0.0
  %1585 = vmatpush1.msra.mxu0 0.0
  %1586 = vmatprep.subr.mxu0 0.0
  %1587 = vmatpush1.msra.mxu0 0.0
  %1588 = vmatprep.subr.mxu0 0.0
  %1589 = vmatpush1.msra.mxu0 0.0
  %1590 = vmatprep.subr.mxu0 0.0
  %1591 = vmatpush1.msra.mxu0 0.0
  %1592 = vmatprep.subr.mxu0 0.0
  %1593 = vmatpush1.msra.mxu0 0.0
  %1594 = vmatprep.subr.mxu0 0.0
  %1595 = vmatpush1.msra.mxu0 0.0
  %1596 = vmatprep.subr.mxu0 0.0
  %1597 = vmatpush1.msra.mxu0 0.0
  %1598 = vmatprep.subr.mxu0 0.0
  %1599 = vmatpush1.msra.mxu0 0.0
  %1600 = vmatprep.subr.mxu0 0.0
  %1601 = vmatpush1.msra.mxu0 0.0
  %1602 = vmatprep.subr.mxu0 0.0
  %1603 = vmatpush1.msra.mxu0 %v1476
  %1604 = vmatprep.subr.mxu0 0.0
  %1605 = vmatpush1.msra.mxu0 %v1475
  %1606 = vmatprep.subr.mxu0 0.0
  %1607 = vmatpush1.msra.mxu0 %v1474
  %1608 = vmatprep.subr.mxu0 0.0
  %1609 = vmatpush1.msra.mxu0 %v1473
  %1610 = vmatprep.subr.mxu0 0.0
  %1611 = vmatpush2.msra.mxu0 0.0
  %1612 = vmatprep.subr.mxu0 0.0
  %1613 = vmatpush2.msra.mxu0 0.0
  %1614 = vmatprep.subr.mxu0 0.0
  %1615 = vmatpush2.msra.mxu0 0.0
  %1616 = vmatprep.subr.mxu0 0.0
  %1617 = vmatpush2.msra.mxu0 0.0
  %1618 = vmatprep.subr.mxu0 0.0
  %1619 = vmatpush2.msra.mxu0 0.0
  %1620 = vmatprep.subr.mxu0 0.0
  %1621 = vmatpush2.msra.mxu0 0.0
  %1622 = vmatprep.subr.mxu0 0.0
  %1623 = vmatpush2.msra.mxu0 0.0
  %1624 = vmatprep.subr.mxu0 0.0
  %1625 = vmatpush2.msra.mxu0 0.0
  %1626 = vmatprep.subr.mxu0 0.0
  %1627 = vmatpush2.msra.mxu0 0.0
  %1628 = vmatprep.subr.mxu0 0.0
  %1629 = vmatpush2.msra.mxu0 0.0
  %1630 = vmatprep.subr.mxu0 0.0
  %1631 = vmatpush2.msra.mxu0 0.0
  %1632 = vmatprep.subr.mxu0 0.0
  %1633 = vmatpush2.msra.mxu0 0.0
  %1634 = vmatprep.subr.mxu0 0.0
  %1635 = vmatpush2.msra.mxu0 0.0
  %1636 = vmatprep.subr.mxu0 0.0
  %1637 = vmatpush2.msra.mxu0 0.0
  %1638 = vmatprep.subr.mxu0 0.0
  %1639 = vmatpush2.msra.mxu0 0.0
  %1640 = vmatprep.subr.mxu0 0.0
  %1641 = vmatpush2.msra.mxu0 0.0
  %1642 = vmatprep.mubr.f32.mxu0 0.0
  %1643 = vmatmul.mubr.f32.gmra.mxu0 %v1576
  %v1644 = vpop.f32.mrf.mxu0
  %v1645 = vadd.f32 %v1572, %v1644
  %v1646 = vpop.f32.mrf.mxu0
  %1647 = vdwg.mxu0
  %s1648 = sld [smem:[#allocation2]]
  %v1649 = vstv %s1648
  %v1650 = vadd.f32 %v1645, %v1649
  %1652 = vset.pattern.permute.xlu0 0
  %1653 = vperm.xlu0 %1652, %v1650
  %v1654 = vpop.permute.xlu0 %1653
  %1656 = vst [vmem:[%s13] sm:$0xff] %v1654
  // Predicated region
  $region54: #{_forward_impl.1} parent=0 // pred_check
    _
  $region55: #{_forward_impl.1} parent=0 // pred_check_branch
    %1658 = sbr.rel (0) target = $region57
  $region56: #{_forward_impl.1} parent=0 // pred_region
    _
  $region57: #{_forward_impl.1} parent=0 // pred_fallthru
    _
  // Predicated region
  $region58: #{_forward_impl.1} parent=0 // pred_check
    _
  $region59: #{_forward_impl.1} parent=0 // pred_check_branch
    %1660 = sbr.rel (0) target = $region61
  $region60: #{_forward_impl.1} parent=0 // pred_region
    _
  $region61: #{_forward_impl.1} parent=0 // pred_fallthru
    _

</llo_original>
